<compile_context>
chip_gen: v7x
topology: tpu7x:2x2x1
jax: 0.10.0
libtpu: 0.0.40
codegen_flags: <defaults>
</compile_context>

<pallas_src>
import functools
import math

import jax
import jax.numpy as jnp
from jax.experimental import pallas as pl
from jax.experimental.pallas import tpu as pltpu


# 48 MiB: fits v7x's 64 MiB physical VMEM with headroom and is well inside
# v5e/v6e's 128 MiB (and above v5e's 16 MiB scoped default).
# TODO(synk): sweep per generation (64-96 MiB pays off on v6e at tq=512).
_VMEM_LIMIT_BYTES = 48 * 1024 * 1024

# Tile target: 256 fills the 2x256x256 MXU (v6e/v7x) and keeps the K/V-stream
# arithmetic intensity above the HBM ridge on all generations.
# TODO(synk): sweep 256-512 per generation / shape.
_TILE_TARGET = 256


# ---------------------------------------------------------------------------
# Kernel 1: Pre-LN + QKV projection + head split
# ---------------------------------------------------------------------------
def ln_qkv_kernel(x_ref, wqkv_ref, gamma_ref, beta_ref,
                  q_ref, k_ref, v_ref, *,
                  eps: float, num_heads: int, head_dim: int):
    """x_ref: (1, TS, H) | wqkv_ref: (H, 3H) bf16 (Q cols pre-scaled)
    gamma/beta: (1, H) f32 | q/k/v_ref: (1, nh, TS, hd) bf16."""
    hidden = num_heads * head_dim
    x = x_ref[0].astype(jnp.float32)                        # (TS, H)
    mean = jnp.mean(x, axis=-1, keepdims=True)
    xc = x - mean
    var = jnp.mean(xc * xc, axis=-1, keepdims=True)
    x_ln = xc * jax.lax.rsqrt(var + eps)
    x_ln = x_ln * gamma_ref[...] + beta_ref[...]            # (TS, H)
    # bf16 MXU operands, f32 accumulation.
    qkv = jnp.dot(x_ln.astype(wqkv_ref.dtype), wqkv_ref[...],
                  preferred_element_type=jnp.float32)       # (TS, 3H)
    qkv = qkv.astype(q_ref.dtype)
    # In-kernel head split (static lane slices): q/k/v leave this kernel
    # already in (nh, TS, hd) layout, so the wrapper needs no XLA
    # reshape/transpose (saves a full HBM round trip of the qkv slab).
    for h in range(num_heads):
        lo = h * head_dim
        q_ref[0, h] = qkv[:, lo:lo + head_dim]
        k_ref[0, h] = qkv[:, hidden + lo:hidden + lo + head_dim]
        v_ref[0, h] = qkv[:, 2 * hidden + lo:2 * hidden + lo + head_dim]


# ---------------------------------------------------------------------------
# Kernel 2: flash attention + output projection + residual
# ---------------------------------------------------------------------------
def flash_mha_kernel(q_ref, k_ref, v_ref, wout_ref, xres_ref, o_ref,
                     m_ref, l_ref, acc_ref, attn_ref, *,
                     num_heads: int, head_dim: int, tq: int, tk: int,
                     is_causal: bool):
    """q_ref:    (1, nh, TQ, hd) bf16  (already scaled by 1/sqrt(hd))
       k_ref:    (1, nh, TK, hd) bf16
       v_ref:    (1, nh, TK, hd) bf16
       wout_ref: (H, H)          bf16  (W_out^T)
       xres_ref: (1, TQ, H)      residual input
       o_ref:    (1, TQ, H)      output
       m/l:      (nh, TQ, 1) f32 online-softmax running max / denom
       acc:      (nh, TQ, hd) f32 un-normalized output accumulator
       attn:     (TQ, H) bf16 lane-dense head re-pack scratch"""
    qi = pl.program_id(1)
    ki = pl.program_id(2)
    nk = pl.num_programs(2)

    @pl.when(ki == 0)
    def _init():
        m_ref[...] = jnp.full(m_ref.shape, -jnp.inf, m_ref.dtype)
        l_ref[...] = jnp.zeros(l_ref.shape, l_ref.dtype)
        acc_ref[...] = jnp.zeros(acc_ref.shape, acc_ref.dtype)

    def _online_softmax_update(apply_mask: bool):
        q = q_ref[0]                                        # (nh, TQ, hd) bf16
        k = k_ref[0]                                        # (nh, TK, hd) bf16
        v = v_ref[0]                                        # (nh, TK, hd) bf16
        # Q.K^T: contraction over hd, batched over heads (no explicit k.T).
        s = jnp.einsum("hqd,hkd->hqk", q, k,
                       preferred_element_type=jnp.float32)  # (nh, TQ, TK) f32
        if apply_mask:
            row = qi * tq + jax.lax.broadcasted_iota(jnp.int32, (tq, tk), 0)
            col = ki * tk + jax.lax.broadcasted_iota(jnp.int32, (tq, tk), 1)
            s = s + jnp.where(col > row, -jnp.inf, 0.0)[None, :, :]
        m_prev = m_ref[...]
        m_new = jnp.maximum(m_prev, jnp.max(s, axis=-1, keepdims=True))
        alpha = jnp.exp(m_prev - m_new)
        p = jnp.exp(s - m_new)                              # (nh, TQ, TK)
        l_ref[...] = alpha * l_ref[...] + jnp.sum(p, axis=-1, keepdims=True)
        pv = jnp.einsum("hqk,hkd->hqd", p.astype(v.dtype), v,
                        preferred_element_type=jnp.float32)  # (nh, TQ, hd)
        acc_ref[...] = alpha * acc_ref[...] + pv
        m_ref[...] = m_new

    if is_causal:
        first_row = qi * tq
        last_row = qi * tq + (tq - 1)
        first_col = ki * tk
        last_col = ki * tk + (tk - 1)

        # Fully-below-diagonal KV tile: processed, no mask work needed.
        @pl.when(last_col <= first_row)
        def _below_diag():
            _online_softmax_update(apply_mask=False)

        # Diagonal-crossing KV tile: build & apply the causal mask.
        @pl.when(jnp.logical_and(first_col <= last_row, last_col > first_row))
        def _on_diag():
            _online_softmax_update(apply_mask=True)
        # Fully-above-diagonal tiles fall through (compute skipped); their K/V
        # DMA is also avoided via the clamped index_map in the wrapper.
    else:
        _online_softmax_update(apply_mask=False)

    @pl.when(ki == nk - 1)
    def _finalize():
        # Normalize once at the end (exact division; runs once per q tile).
        o = acc_ref[...] / l_ref[...]                       # (nh, TQ, hd) f32
        # Re-pack heads into a lane-dense (TQ, H) slab in VMEM, then a single
        # (TQ, H) @ (H, H) projection: K = H keeps the MXU fed (no per-head
        # tiny matmuls) and there is no (TQ, H) f32 register accumulator left
        # live across an unrolled loop (no vreg spill).
        for h in range(num_heads):
            lo = h * head_dim
            attn_ref[:, lo:lo + head_dim] = o[h].astype(attn_ref.dtype)
        proj = jnp.dot(attn_ref[...], wout_ref[...],
                       preferred_element_type=jnp.float32)  # (TQ, H) f32
        o_ref[0] = (xres_ref[0].astype(jnp.float32) + proj).astype(o_ref.dtype)


# ---------------------------------------------------------------------------
# Wrapper
# ---------------------------------------------------------------------------
def _pick_tile(n: int, target: int) -> int:
    """Largest tile <= target that divides n and is a multiple of 8, else n."""
    if n <= target:
        return n
    for t in range(target, 7, -1):
        if n % t == 0 and t % 8 == 0:
            return t
    return n


def multi_head_attention(hidden_states, w_qkv, w_out, gamma, beta, *,
                         num_heads: int, eps: float = 1e-5,
                         is_causal: bool = False):
    """hidden_states: [B,S,H]; w_qkv: [3H,H]; w_out: [H,H]; gamma/beta: [H]."""
    B, S, H = hidden_states.shape
    if H % num_heads != 0:
        raise ValueError("hidden_size must be divisible by num_heads")
    hd = H // num_heads
    scale = 1.0 / math.sqrt(hd)

    # --- weight prep (plain JAX, once per call) ---
    # Fold the attention scale into the Q columns of W_qkv^T and ship both
    # projection weights in bf16 (halves HBM->VMEM DMA / residency).
    # TODO(synk): on v7x, fp8 weights + per-channel scales would halve this
    # again and double projection MXU throughput.
    w_qkv_t = jnp.transpose(w_qkv).astype(jnp.float32)               # (H, 3H)
    col_scale = jnp.concatenate(
        [jnp.full((H,), scale, jnp.float32), jnp.ones((2 * H,), jnp.float32)])
    w_qkv_t = (w_qkv_t * col_scale[None, :]).astype(jnp.bfloat16)
    w_out_t = jnp.transpose(w_out).astype(jnp.bfloat16)              # (H, H)
    gamma2 = gamma.reshape(1, H).astype(jnp.float32)
    beta2 = beta.reshape(1, H).astype(jnp.float32)

    tq = _pick_tile(S, _TILE_TARGET)
    # v7x megacore: keep >= 2 parallel (batch, q-block) units so neither of
    # the two TensorCores idles for single-batch shapes.
    if B * (S // tq) < 2:
        half = _pick_tile(S, max(8, tq // 2))
        if half < tq:
            tq = half
    tk = tq          # causal block skipping / masking below assumes tq == tk
    ts = tq          # kernel-1 sequence tile

    def _run(single_buffer_weights: bool):
        def w_spec(shape, index_map):
            if single_buffer_weights:
                # Grid-invariant operand: a single buffer halves its VMEM
                # residency (the default pipeline double-buffers everything).
                return pl.BlockSpec(shape, index_map,
                                    pipeline_mode=pl.Buffered(1))
            return pl.BlockSpec(shape, index_map)

        # --- kernel 1: LayerNorm + QKV projection + head split ---
        # TODO(synk): for very large H (>= ~4096, mandatory on v7x), K-tile
        # the contraction (extra grid axis + f32 accumulator scratch) so the
        # full (H, 3H) weight need not stay resident in VMEM.
        qkv_struct = jax.ShapeDtypeStruct((B, num_heads, S, hd), jnp.bfloat16)
        qkv_out_spec = pl.BlockSpec((1, num_heads, ts, hd),
                                    lambda b, i: (b, 0, i, 0))
        q, k, v = pl.pallas_call(
            functools.partial(ln_qkv_kernel, eps=eps, num_heads=num_heads,
                              head_dim=hd),
            out_shape=(qkv_struct, qkv_struct, qkv_struct),
            grid_spec=pltpu.PrefetchScalarGridSpec(
                num_scalar_prefetch=0,
                grid=(B, S // ts),
                in_specs=[
                    pl.BlockSpec((1, ts, H), lambda b, i: (b, i, 0)),
                    w_spec((H, 3 * H), lambda b, i: (0, 0)),
                    w_spec((1, H), lambda b, i: (0, 0)),
                    w_spec((1, H), lambda b, i: (0, 0)),
                ],
                out_specs=(qkv_out_spec, qkv_out_spec, qkv_out_spec),
            ),
            compiler_params=pltpu.CompilerParams(
                dimension_semantics=("parallel", "parallel"),
                vmem_limit_bytes=_VMEM_LIMIT_BYTES),
        )(hidden_states, w_qkv_t, gamma2, beta2)

        # --- kernel 2: flash attention + out-proj + residual ---
        if is_causal:
            # Clamp the K/V block index for above-diagonal (skipped) steps so
            # their DMA re-uses the previous block instead of fetching a tile
            # the kernel never reads (pl.when only skips compute, not DMA).
            kv_map = lambda b, i, j: (b, 0, jnp.minimum(j, i), 0)
        else:
            kv_map = lambda b, i, j: (b, 0, j, 0)

        out = pl.pallas_call(
            functools.partial(flash_mha_kernel, num_heads=num_heads,
                              head_dim=hd, tq=tq, tk=tk, is_causal=is_causal),
            out_shape=jax.ShapeDtypeStruct((B, S, H), hidden_states.dtype),
            grid_spec=pltpu.PrefetchScalarGridSpec(
                num_scalar_prefetch=0,
                grid=(B, S // tq, S // tk),        # KV (reduction) axis last
                in_specs=[
                    pl.BlockSpec((1, num_heads, tq, hd),
                                 lambda b, i, j: (b, 0, i, 0)),
                    pl.BlockSpec((1, num_heads, tk, hd), kv_map),
                    pl.BlockSpec((1, num_heads, tk, hd), kv_map),
                    w_spec((H, H), lambda b, i, j: (0, 0)),
                    pl.BlockSpec((1, tq, H), lambda b, i, j: (b, i, 0)),
                ],
                out_specs=pl.BlockSpec((1, tq, H), lambda b, i, j: (b, i, 0)),
                scratch_shapes=[
                    pltpu.VMEM((num_heads, tq, 1), jnp.float32),    # m
                    pltpu.VMEM((num_heads, tq, 1), jnp.float32),    # l
                    pltpu.VMEM((num_heads, tq, hd), jnp.float32),   # acc
                    pltpu.VMEM((tq, H), jnp.bfloat16),              # head pack
                ],
            ),
            compiler_params=pltpu.CompilerParams(
                dimension_semantics=("parallel", "parallel", "arbitrary"),
                vmem_limit_bytes=_VMEM_LIMIT_BYTES),
        )(q, k, v, w_out_t, hidden_states)
        return out

    try:
        return _run(single_buffer_weights=True)
    except Exception:
        # pl.Buffered(1) (single-buffered grid-invariant weights) unavailable
        # on this jax build -> fall back to default double buffering.
        return _run(single_buffer_weights=False)


# ---------------------------------------------------------------------------
# Reference + test
# ---------------------------------------------------------------------------
def _xavier_uniform(key, shape, dtype=jnp.float32):
    fan_out, fan_in = shape
    bound = math.sqrt(6.0 / (fan_in + fan_out))
    return jax.random.uniform(key, shape, dtype, minval=-bound, maxval=bound)


def _reference(x, w_qkv, w_out, gamma, beta, *, num_heads, eps, is_causal):
    """Plain-JAX f32 reference of the PyTorch forward (eval mode, Pre-LN)."""
    B, S, H = x.shape
    hd = H // num_heads
    residual = x
    mean = jnp.mean(x, axis=-1, keepdims=True)
    var = jnp.mean((x - mean) ** 2, axis=-1, keepdims=True)
    x_ln = (x - mean) / jnp.sqrt(var + eps) * gamma + beta
    qkv = x_ln @ w_qkv.T
    qkv = qkv.reshape(B, S, 3, num_heads, hd).transpose(2, 0, 3, 1, 4)
    q, k, v = qkv[0], qkv[1], qkv[2]
    s = jnp.einsum("bhqd,bhkd->bhqk", q, k) / math.sqrt(hd)
    if is_causal:
        mask = jnp.triu(jnp.ones((S, S), bool), k=1)
        s = jnp.where(mask, -jnp.inf, s)
    p = jax.nn.softmax(s, axis=-1)
    o = jnp.einsum("bhqk,bhkd->bhqd", p, v)
    o = o.transpose(0, 2, 1, 3).reshape(B, S, H)
    return residual + o @ w_out.T


def _run_case(key, B, S, H, num_heads, is_causal, eps=1e-5):
    k_x, k_qkv, k_out = jax.random.split(key, 3)
    x = jax.random.normal(k_x, (B, S, H), jnp.float32)
    w_qkv = _xavier_uniform(k_qkv, (3 * H, H))     # like nn.Linear(H, 3H).weight
    w_out = _xavier_uniform(k_out, (H, H))         # like nn.Linear(H, H).weight
    gamma = jnp.ones((H,), jnp.float32)
    beta = jnp.zeros((H,), jnp.float32)

    out = multi_head_attention(x, w_qkv, w_out, gamma, beta,
                               num_heads=num_heads, eps=eps,
                               is_causal=is_causal)
    out = jax.block_until_ready(out)
    ref = _reference(x, w_qkv, w_out, gamma, beta,
                     num_heads=num_heads, eps=eps, is_causal=is_causal)
    assert out.shape == (B, S, H)
    # bf16 MXU operands => loosened tolerance vs the f32 reference.
    err = float(jnp.max(jnp.abs(out - ref)))
    assert jnp.allclose(out, ref, atol=5e-2, rtol=5e-2), \
        f"mismatch (max abs err {err})"


if __name__ == "__main__":
    key = jax.random.PRNGKey(0)
    k1, k2, k3 = jax.random.split(key, 3)
    # Small shape consistent with the module (B=2, S=8, H=32, 8 heads).
    _run_case(k1, B=2, S=8, H=32, num_heads=8, is_causal=False)
    # Multi-tile flash path (2 q-blocks x 2 kv-blocks at tq=tk=256) with
    # causal KV-block skipping + clamped (DMA-free) above-diagonal tiles.
    _run_case(k2, B=2, S=512, H=128, num_heads=2, is_causal=True)
    # Single-batch shape exercising the megacore tile adjustment.
    _run_case(k3, B=1, S=256, H=128, num_heads=4, is_causal=False)
    # TODO(synk): attn_mask (padding masks), training-mode dropout (p=0.1),
    # Post-LN (norm_first=False) and include_norm_residual=False variants are
    # not implemented; dropout is a no-op in eval mode.
    print("KERNEL_OK")
</pallas_src>

<mosaic_0001>
module attributes {stable_mosaic.version = 11 : i64} {
  func.func @ln_qkv_kernel(%arg0: i32, %arg1: i32, %arg2: memref<1x8x32xf32, #tpu.memory_space<vmem>>, %arg3: memref<32x96xbf16, #tpu.memory_space<vmem>>, %arg4: memref<1x32xf32, #tpu.memory_space<vmem>>, %arg5: memref<1x32xf32, #tpu.memory_space<vmem>>, %arg6: memref<1x8x8x4xbf16, #tpu.memory_space<vmem>>, %arg7: memref<1x8x8x4xbf16, #tpu.memory_space<vmem>>, %arg8: memref<1x8x8x4xbf16, #tpu.memory_space<vmem>>) attributes {dimension_semantics = [#tpu.dimension_semantics<parallel>, #tpu.dimension_semantics<parallel>], iteration_bounds = array<i64: 2, 1>, scalar_prefetch = 0 : i64, scratch_operands = 0 : i64, tpu.core_type = #tpu.core_type<tc>, window_params = [{transform_indices = @transform_0, window_bounds = array<i64: 1, 8, 32>}, {pipeline_mode = #tpu.pipeline_mode<synchronous>, transform_indices = @transform_1, window_bounds = array<i64: 32, 96>}, {pipeline_mode = #tpu.pipeline_mode<synchronous>, transform_indices = @transform_2, window_bounds = array<i64: 1, 32>}, {pipeline_mode = #tpu.pipeline_mode<synchronous>, transform_indices = @transform_3, window_bounds = array<i64: 1, 32>}, {transform_indices = @transform_4, window_bounds = array<i64: 1, 8, 8, 4>}, {transform_indices = @transform_5, window_bounds = array<i64: 1, 8, 8, 4>}, {transform_indices = @transform_6, window_bounds = array<i64: 1, 8, 8, 4>}]} {
    %c0 = arith.constant 0 : index
    %c0_0 = arith.constant 0 : index
    %c0_1 = arith.constant 0 : index
    %0 = vector.load %arg2[%c0, %c0_0, %c0_1] : memref<1x8x32xf32, #tpu.memory_space<vmem>>, vector<1x8x32xf32>
    %1 = vector.shape_cast %0 : vector<1x8x32xf32> to vector<8x32xf32>
    %cst = arith.constant dense<0.000000e+00> : vector<8xf32>
    %2 = vector.multi_reduction <add>, %1, %cst [1] : vector<8x32xf32> to vector<8xf32>
    %3 = vector.shape_cast %2 : vector<8xf32> to vector<8x1xf32>
    %cst_2 = arith.constant 3.200000e+01 : f32
    %4 = vector.broadcast %cst_2 : f32 to vector<8x1xf32>
    %5 = arith.divf %3, %4 : vector<8x1xf32>
    %6 = vector.broadcast %5 : vector<8x1xf32> to vector<8x32xf32>
    %7 = arith.subf %1, %6 : vector<8x32xf32>
    %8 = arith.mulf %7, %7 : vector<8x32xf32>
    %cst_3 = arith.constant dense<0.000000e+00> : vector<8xf32>
    %9 = vector.multi_reduction <add>, %8, %cst_3 [1] : vector<8x32xf32> to vector<8xf32>
    %10 = vector.shape_cast %9 : vector<8xf32> to vector<8x1xf32>
    %cst_4 = arith.constant 3.200000e+01 : f32
    %11 = vector.broadcast %cst_4 : f32 to vector<8x1xf32>
    %12 = arith.divf %10, %11 : vector<8x1xf32>
    %cst_5 = arith.constant 9.99999974E-6 : f32
    %13 = vector.broadcast %cst_5 : f32 to vector<8x1xf32>
    %14 = arith.addf %12, %13 : vector<8x1xf32>
    %15 = math.rsqrt %14 : vector<8x1xf32>
    %16 = vector.broadcast %15 : vector<8x1xf32> to vector<8x32xf32>
    %17 = arith.mulf %7, %16 : vector<8x32xf32>
    %c0_6 = arith.constant 0 : index
    %c0_7 = arith.constant 0 : index
    %18 = vector.load %arg4[%c0_6, %c0_7] : memref<1x32xf32, #tpu.memory_space<vmem>>, vector<1x32xf32>
    %19 = vector.broadcast %18 : vector<1x32xf32> to vector<8x32xf32>
    %20 = arith.mulf %17, %19 : vector<8x32xf32>
    %c0_8 = arith.constant 0 : index
    %c0_9 = arith.constant 0 : index
    %21 = vector.load %arg5[%c0_8, %c0_9] : memref<1x32xf32, #tpu.memory_space<vmem>>, vector<1x32xf32>
    %22 = vector.broadcast %21 : vector<1x32xf32> to vector<8x32xf32>
    %23 = arith.addf %20, %22 : vector<8x32xf32>
    %24 = arith.truncf %23 : vector<8x32xf32> to vector<8x32xbf16>
    %c0_10 = arith.constant 0 : index
    %c0_11 = arith.constant 0 : index
    %25 = vector.load %arg3[%c0_10, %c0_11] : memref<32x96xbf16, #tpu.memory_space<vmem>>, vector<32x96xbf16>
    %cst_12 = arith.constant dense<0.000000e+00> : vector<8x96xf32>
    %26 = tpu.matmul %24, %25, %cst_12 {dimension_numbers = #tpu.dot_dimension_numbers<[1], [0], [0], [1], [0, 0, 1, 1], [], []>} : vector<8x32xbf16>, vector<32x96xbf16>, vector<8x96xf32> -> vector<8x96xf32>
    %27 = arith.truncf %26 : vector<8x96xf32> to vector<8x96xbf16>
    %28 = vector.extract_strided_slice %27 {offsets = [0, 0], sizes = [8, 4], strides = [1, 1]} : vector<8x96xbf16> to vector<8x4xbf16>
    %c0_13 = arith.constant 0 : index
    %c0_14 = arith.constant 0 : index
    %c0_15 = arith.constant 0 : index
    %c0_16 = arith.constant 0 : index
    %29 = vector.load %arg6[%c0_13, %c0_14, %c0_15, %c0_16] : memref<1x8x8x4xbf16, #tpu.memory_space<vmem>>, vector<1x1x8x4xbf16>
    %30 = vector.shape_cast %29 : vector<1x1x8x4xbf16> to vector<8x4xbf16>
    %31 = vector.shape_cast %28 : vector<8x4xbf16> to vector<1x1x8x4xbf16>
    tpu.vector_store %arg6[%c0_13, %c0_14, %c0_15, %c0_16], %31 {strides = array<i32>} : memref<1x8x8x4xbf16, #tpu.memory_space<vmem>>, vector<1x1x8x4xbf16>,
    %32 = vector.extract_strided_slice %27 {offsets = [0, 32], sizes = [8, 4], strides = [1, 1]} : vector<8x96xbf16> to vector<8x4xbf16>
    %c0_17 = arith.constant 0 : index
    %c0_18 = arith.constant 0 : index
    %c0_19 = arith.constant 0 : index
    %c0_20 = arith.constant 0 : index
    %33 = vector.load %arg7[%c0_17, %c0_18, %c0_19, %c0_20] : memref<1x8x8x4xbf16, #tpu.memory_space<vmem>>, vector<1x1x8x4xbf16>
    %34 = vector.shape_cast %33 : vector<1x1x8x4xbf16> to vector<8x4xbf16>
    %35 = vector.shape_cast %32 : vector<8x4xbf16> to vector<1x1x8x4xbf16>
    tpu.vector_store %arg7[%c0_17, %c0_18, %c0_19, %c0_20], %35 {strides = array<i32>} : memref<1x8x8x4xbf16, #tpu.memory_space<vmem>>, vector<1x1x8x4xbf16>,
    %36 = vector.extract_strided_slice %27 {offsets = [0, 64], sizes = [8, 4], strides = [1, 1]} : vector<8x96xbf16> to vector<8x4xbf16>
    %c0_21 = arith.constant 0 : index
    %c0_22 = arith.constant 0 : index
    %c0_23 = arith.constant 0 : index
    %c0_24 = arith.constant 0 : index
    %37 = vector.load %arg8[%c0_21, %c0_22, %c0_23, %c0_24] : memref<1x8x8x4xbf16, #tpu.memory_space<vmem>>, vector<1x1x8x4xbf16>
    %38 = vector.shape_cast %37 : vector<1x1x8x4xbf16> to vector<8x4xbf16>
    %39 = vector.shape_cast %36 : vector<8x4xbf16> to vector<1x1x8x4xbf16>
    tpu.vector_store %arg8[%c0_21, %c0_22, %c0_23, %c0_24], %39 {strides = array<i32>} : memref<1x8x8x4xbf16, #tpu.memory_space<vmem>>, vector<1x1x8x4xbf16>,
    %40 = vector.extract_strided_slice %27 {offsets = [0, 4], sizes = [8, 4], strides = [1, 1]} : vector<8x96xbf16> to vector<8x4xbf16>
    %c0_25 = arith.constant 0 : index
    %c1 = arith.constant 1 : index
    %c0_26 = arith.constant 0 : index
    %c0_27 = arith.constant 0 : index
    %41 = vector.load %arg6[%c0_25, %c1, %c0_26, %c0_27] : memref<1x8x8x4xbf16, #tpu.memory_space<vmem>>, vector<1x1x8x4xbf16>
    %42 = vector.shape_cast %41 : vector<1x1x8x4xbf16> to vector<8x4xbf16>
    %43 = vector.shape_cast %40 : vector<8x4xbf16> to vector<1x1x8x4xbf16>
    tpu.vector_store %arg6[%c0_25, %c1, %c0_26, %c0_27], %43 {strides = array<i32>} : memref<1x8x8x4xbf16, #tpu.memory_space<vmem>>, vector<1x1x8x4xbf16>,
    %44 = vector.extract_strided_slice %27 {offsets = [0, 36], sizes = [8, 4], strides = [1, 1]} : vector<8x96xbf16> to vector<8x4xbf16>
    %c0_28 = arith.constant 0 : index
    %c1_29 = arith.constant 1 : index
    %c0_30 = arith.constant 0 : index
    %c0_31 = arith.constant 0 : index
    %45 = vector.load %arg7[%c0_28, %c1_29, %c0_30, %c0_31] : memref<1x8x8x4xbf16, #tpu.memory_space<vmem>>, vector<1x1x8x4xbf16>
    %46 = vector.shape_cast %45 : vector<1x1x8x4xbf16> to vector<8x4xbf16>
    %47 = vector.shape_cast %44 : vector<8x4xbf16> to vector<1x1x8x4xbf16>
    tpu.vector_store %arg7[%c0_28, %c1_29, %c0_30, %c0_31], %47 {strides = array<i32>} : memref<1x8x8x4xbf16, #tpu.memory_space<vmem>>, vector<1x1x8x4xbf16>,
    %48 = vector.extract_strided_slice %27 {offsets = [0, 68], sizes = [8, 4], strides = [1, 1]} : vector<8x96xbf16> to vector<8x4xbf16>
    %c0_32 = arith.constant 0 : index
    %c1_33 = arith.constant 1 : index
    %c0_34 = arith.constant 0 : index
    %c0_35 = arith.constant 0 : index
    %49 = vector.load %arg8[%c0_32, %c1_33, %c0_34, %c0_35] : memref<1x8x8x4xbf16, #tpu.memory_space<vmem>>, vector<1x1x8x4xbf16>
    %50 = vector.shape_cast %49 : vector<1x1x8x4xbf16> to vector<8x4xbf16>
    %51 = vector.shape_cast %48 : vector<8x4xbf16> to vector<1x1x8x4xbf16>
    tpu.vector_store %arg8[%c0_32, %c1_33, %c0_34, %c0_35], %51 {strides = array<i32>} : memref<1x8x8x4xbf16, #tpu.memory_space<vmem>>, vector<1x1x8x4xbf16>,
    %52 = vector.extract_strided_slice %27 {offsets = [0, 8], sizes = [8, 4], strides = [1, 1]} : vector<8x96xbf16> to vector<8x4xbf16>
    %c0_36 = arith.constant 0 : index
    %c2 = arith.constant 2 : index
    %c0_37 = arith.constant 0 : index
    %c0_38 = arith.constant 0 : index
    %53 = vector.load %arg6[%c0_36, %c2, %c0_37, %c0_38] : memref<1x8x8x4xbf16, #tpu.memory_space<vmem>>, vector<1x1x8x4xbf16>
    %54 = vector.shape_cast %53 : vector<1x1x8x4xbf16> to vector<8x4xbf16>
    %55 = vector.shape_cast %52 : vector<8x4xbf16> to vector<1x1x8x4xbf16>
    tpu.vector_store %arg6[%c0_36, %c2, %c0_37, %c0_38], %55 {strides = array<i32>} : memref<1x8x8x4xbf16, #tpu.memory_space<vmem>>, vector<1x1x8x4xbf16>,
    %56 = vector.extract_strided_slice %27 {offsets = [0, 40], sizes = [8, 4], strides = [1, 1]} : vector<8x96xbf16> to vector<8x4xbf16>
    %c0_39 = arith.constant 0 : index
    %c2_40 = arith.constant 2 : index
    %c0_41 = arith.constant 0 : index
    %c0_42 = arith.constant 0 : index
    %57 = vector.load %arg7[%c0_39, %c2_40, %c0_41, %c0_42] : memref<1x8x8x4xbf16, #tpu.memory_space<vmem>>, vector<1x1x8x4xbf16>
    %58 = vector.shape_cast %57 : vector<1x1x8x4xbf16> to vector<8x4xbf16>
    %59 = vector.shape_cast %56 : vector<8x4xbf16> to vector<1x1x8x4xbf16>
    tpu.vector_store %arg7[%c0_39, %c2_40, %c0_41, %c0_42], %59 {strides = array<i32>} : memref<1x8x8x4xbf16, #tpu.memory_space<vmem>>, vector<1x1x8x4xbf16>,
    %60 = vector.extract_strided_slice %27 {offsets = [0, 72], sizes = [8, 4], strides = [1, 1]} : vector<8x96xbf16> to vector<8x4xbf16>
    %c0_43 = arith.constant 0 : index
    %c2_44 = arith.constant 2 : index
    %c0_45 = arith.constant 0 : index
    %c0_46 = arith.constant 0 : index
    %61 = vector.load %arg8[%c0_43, %c2_44, %c0_45, %c0_46] : memref<1x8x8x4xbf16, #tpu.memory_space<vmem>>, vector<1x1x8x4xbf16>
    %62 = vector.shape_cast %61 : vector<1x1x8x4xbf16> to vector<8x4xbf16>
    %63 = vector.shape_cast %60 : vector<8x4xbf16> to vector<1x1x8x4xbf16>
    tpu.vector_store %arg8[%c0_43, %c2_44, %c0_45, %c0_46], %63 {strides = array<i32>} : memref<1x8x8x4xbf16, #tpu.memory_space<vmem>>, vector<1x1x8x4xbf16>,
    %64 = vector.extract_strided_slice %27 {offsets = [0, 12], sizes = [8, 4], strides = [1, 1]} : vector<8x96xbf16> to vector<8x4xbf16>
    %c0_47 = arith.constant 0 : index
    %c3 = arith.constant 3 : index
    %c0_48 = arith.constant 0 : index
    %c0_49 = arith.constant 0 : index
    %65 = vector.load %arg6[%c0_47, %c3, %c0_48, %c0_49] : memref<1x8x8x4xbf16, #tpu.memory_space<vmem>>, vector<1x1x8x4xbf16>
    %66 = vector.shape_cast %65 : vector<1x1x8x4xbf16> to vector<8x4xbf16>
    %67 = vector.shape_cast %64 : vector<8x4xbf16> to vector<1x1x8x4xbf16>
    tpu.vector_store %arg6[%c0_47, %c3, %c0_48, %c0_49], %67 {strides = array<i32>} : memref<1x8x8x4xbf16, #tpu.memory_space<vmem>>, vector<1x1x8x4xbf16>,
    %68 = vector.extract_strided_slice %27 {offsets = [0, 44], sizes = [8, 4], strides = [1, 1]} : vector<8x96xbf16> to vector<8x4xbf16>
    %c0_50 = arith.constant 0 : index
    %c3_51 = arith.constant 3 : index
    %c0_52 = arith.constant 0 : index
    %c0_53 = arith.constant 0 : index
    %69 = vector.load %arg7[%c0_50, %c3_51, %c0_52, %c0_53] : memref<1x8x8x4xbf16, #tpu.memory_space<vmem>>, vector<1x1x8x4xbf16>
    %70 = vector.shape_cast %69 : vector<1x1x8x4xbf16> to vector<8x4xbf16>
    %71 = vector.shape_cast %68 : vector<8x4xbf16> to vector<1x1x8x4xbf16>
    tpu.vector_store %arg7[%c0_50, %c3_51, %c0_52, %c0_53], %71 {strides = array<i32>} : memref<1x8x8x4xbf16, #tpu.memory_space<vmem>>, vector<1x1x8x4xbf16>,
    %72 = vector.extract_strided_slice %27 {offsets = [0, 76], sizes = [8, 4], strides = [1, 1]} : vector<8x96xbf16> to vector<8x4xbf16>
    %c0_54 = arith.constant 0 : index
    %c3_55 = arith.constant 3 : index
    %c0_56 = arith.constant 0 : index
    %c0_57 = arith.constant 0 : index
    %73 = vector.load %arg8[%c0_54, %c3_55, %c0_56, %c0_57] : memref<1x8x8x4xbf16, #tpu.memory_space<vmem>>, vector<1x1x8x4xbf16>
    %74 = vector.shape_cast %73 : vector<1x1x8x4xbf16> to vector<8x4xbf16>
    %75 = vector.shape_cast %72 : vector<8x4xbf16> to vector<1x1x8x4xbf16>
    tpu.vector_store %arg8[%c0_54, %c3_55, %c0_56, %c0_57], %75 {strides = array<i32>} : memref<1x8x8x4xbf16, #tpu.memory_space<vmem>>, vector<1x1x8x4xbf16>,
    %76 = vector.extract_strided_slice %27 {offsets = [0, 16], sizes = [8, 4], strides = [1, 1]} : vector<8x96xbf16> to vector<8x4xbf16>
    %c0_58 = arith.constant 0 : index
    %c4 = arith.constant 4 : index
    %c0_59 = arith.constant 0 : index
    %c0_60 = arith.constant 0 : index
    %77 = vector.load %arg6[%c0_58, %c4, %c0_59, %c0_60] : memref<1x8x8x4xbf16, #tpu.memory_space<vmem>>, vector<1x1x8x4xbf16>
    %78 = vector.shape_cast %77 : vector<1x1x8x4xbf16> to vector<8x4xbf16>
    %79 = vector.shape_cast %76 : vector<8x4xbf16> to vector<1x1x8x4xbf16>
    tpu.vector_store %arg6[%c0_58, %c4, %c0_59, %c0_60], %79 {strides = array<i32>} : memref<1x8x8x4xbf16, #tpu.memory_space<vmem>>, vector<1x1x8x4xbf16>,
    %80 = vector.extract_strided_slice %27 {offsets = [0, 48], sizes = [8, 4], strides = [1, 1]} : vector<8x96xbf16> to vector<8x4xbf16>
    %c0_61 = arith.constant 0 : index
    %c4_62 = arith.constant 4 : index
    %c0_63 = arith.constant 0 : index
    %c0_64 = arith.constant 0 : index
    %81 = vector.load %arg7[%c0_61, %c4_62, %c0_63, %c0_64] : memref<1x8x8x4xbf16, #tpu.memory_space<vmem>>, vector<1x1x8x4xbf16>
    %82 = vector.shape_cast %81 : vector<1x1x8x4xbf16> to vector<8x4xbf16>
    %83 = vector.shape_cast %80 : vector<8x4xbf16> to vector<1x1x8x4xbf16>
    tpu.vector_store %arg7[%c0_61, %c4_62, %c0_63, %c0_64], %83 {strides = array<i32>} : memref<1x8x8x4xbf16, #tpu.memory_space<vmem>>, vector<1x1x8x4xbf16>,
    %84 = vector.extract_strided_slice %27 {offsets = [0, 80], sizes = [8, 4], strides = [1, 1]} : vector<8x96xbf16> to vector<8x4xbf16>
    %c0_65 = arith.constant 0 : index
    %c4_66 = arith.constant 4 : index
    %c0_67 = arith.constant 0 : index
    %c0_68 = arith.constant 0 : index
    %85 = vector.load %arg8[%c0_65, %c4_66, %c0_67, %c0_68] : memref<1x8x8x4xbf16, #tpu.memory_space<vmem>>, vector<1x1x8x4xbf16>
    %86 = vector.shape_cast %85 : vector<1x1x8x4xbf16> to vector<8x4xbf16>
    %87 = vector.shape_cast %84 : vector<8x4xbf16> to vector<1x1x8x4xbf16>
    tpu.vector_store %arg8[%c0_65, %c4_66, %c0_67, %c0_68], %87 {strides = array<i32>} : memref<1x8x8x4xbf16, #tpu.memory_space<vmem>>, vector<1x1x8x4xbf16>,
    %88 = vector.extract_strided_slice %27 {offsets = [0, 20], sizes = [8, 4], strides = [1, 1]} : vector<8x96xbf16> to vector<8x4xbf16>
    %c0_69 = arith.constant 0 : index
    %c5 = arith.constant 5 : index
    %c0_70 = arith.constant 0 : index
    %c0_71 = arith.constant 0 : index
    %89 = vector.load %arg6[%c0_69, %c5, %c0_70, %c0_71] : memref<1x8x8x4xbf16, #tpu.memory_space<vmem>>, vector<1x1x8x4xbf16>
    %90 = vector.shape_cast %89 : vector<1x1x8x4xbf16> to vector<8x4xbf16>
    %91 = vector.shape_cast %88 : vector<8x4xbf16> to vector<1x1x8x4xbf16>
    tpu.vector_store %arg6[%c0_69, %c5, %c0_70, %c0_71], %91 {strides = array<i32>} : memref<1x8x8x4xbf16, #tpu.memory_space<vmem>>, vector<1x1x8x4xbf16>,
    %92 = vector.extract_strided_slice %27 {offsets = [0, 52], sizes = [8, 4], strides = [1, 1]} : vector<8x96xbf16> to vector<8x4xbf16>
    %c0_72 = arith.constant 0 : index
    %c5_73 = arith.constant 5 : index
    %c0_74 = arith.constant 0 : index
    %c0_75 = arith.constant 0 : index
    %93 = vector.load %arg7[%c0_72, %c5_73, %c0_74, %c0_75] : memref<1x8x8x4xbf16, #tpu.memory_space<vmem>>, vector<1x1x8x4xbf16>
    %94 = vector.shape_cast %93 : vector<1x1x8x4xbf16> to vector<8x4xbf16>
    %95 = vector.shape_cast %92 : vector<8x4xbf16> to vector<1x1x8x4xbf16>
    tpu.vector_store %arg7[%c0_72, %c5_73, %c0_74, %c0_75], %95 {strides = array<i32>} : memref<1x8x8x4xbf16, #tpu.memory_space<vmem>>, vector<1x1x8x4xbf16>,
    %96 = vector.extract_strided_slice %27 {offsets = [0, 84], sizes = [8, 4], strides = [1, 1]} : vector<8x96xbf16> to vector<8x4xbf16>
    %c0_76 = arith.constant 0 : index
    %c5_77 = arith.constant 5 : index
    %c0_78 = arith.constant 0 : index
    %c0_79 = arith.constant 0 : index
    %97 = vector.load %arg8[%c0_76, %c5_77, %c0_78, %c0_79] : memref<1x8x8x4xbf16, #tpu.memory_space<vmem>>, vector<1x1x8x4xbf16>
    %98 = vector.shape_cast %97 : vector<1x1x8x4xbf16> to vector<8x4xbf16>
    %99 = vector.shape_cast %96 : vector<8x4xbf16> to vector<1x1x8x4xbf16>
    tpu.vector_store %arg8[%c0_76, %c5_77, %c0_78, %c0_79], %99 {strides = array<i32>} : memref<1x8x8x4xbf16, #tpu.memory_space<vmem>>, vector<1x1x8x4xbf16>,
    %100 = vector.extract_strided_slice %27 {offsets = [0, 24], sizes = [8, 4], strides = [1, 1]} : vector<8x96xbf16> to vector<8x4xbf16>
    %c0_80 = arith.constant 0 : index
    %c6 = arith.constant 6 : index
    %c0_81 = arith.constant 0 : index
    %c0_82 = arith.constant 0 : index
    %101 = vector.load %arg6[%c0_80, %c6, %c0_81, %c0_82] : memref<1x8x8x4xbf16, #tpu.memory_space<vmem>>, vector<1x1x8x4xbf16>
    %102 = vector.shape_cast %101 : vector<1x1x8x4xbf16> to vector<8x4xbf16>
    %103 = vector.shape_cast %100 : vector<8x4xbf16> to vector<1x1x8x4xbf16>
    tpu.vector_store %arg6[%c0_80, %c6, %c0_81, %c0_82], %103 {strides = array<i32>} : memref<1x8x8x4xbf16, #tpu.memory_space<vmem>>, vector<1x1x8x4xbf16>,
    %104 = vector.extract_strided_slice %27 {offsets = [0, 56], sizes = [8, 4], strides = [1, 1]} : vector<8x96xbf16> to vector<8x4xbf16>
    %c0_83 = arith.constant 0 : index
    %c6_84 = arith.constant 6 : index
    %c0_85 = arith.constant 0 : index
    %c0_86 = arith.constant 0 : index
    %105 = vector.load %arg7[%c0_83, %c6_84, %c0_85, %c0_86] : memref<1x8x8x4xbf16, #tpu.memory_space<vmem>>, vector<1x1x8x4xbf16>
    %106 = vector.shape_cast %105 : vector<1x1x8x4xbf16> to vector<8x4xbf16>
    %107 = vector.shape_cast %104 : vector<8x4xbf16> to vector<1x1x8x4xbf16>
    tpu.vector_store %arg7[%c0_83, %c6_84, %c0_85, %c0_86], %107 {strides = array<i32>} : memref<1x8x8x4xbf16, #tpu.memory_space<vmem>>, vector<1x1x8x4xbf16>,
    %108 = vector.extract_strided_slice %27 {offsets = [0, 88], sizes = [8, 4], strides = [1, 1]} : vector<8x96xbf16> to vector<8x4xbf16>
    %c0_87 = arith.constant 0 : index
    %c6_88 = arith.constant 6 : index
    %c0_89 = arith.constant 0 : index
    %c0_90 = arith.constant 0 : index
    %109 = vector.load %arg8[%c0_87, %c6_88, %c0_89, %c0_90] : memref<1x8x8x4xbf16, #tpu.memory_space<vmem>>, vector<1x1x8x4xbf16>
    %110 = vector.shape_cast %109 : vector<1x1x8x4xbf16> to vector<8x4xbf16>
    %111 = vector.shape_cast %108 : vector<8x4xbf16> to vector<1x1x8x4xbf16>
    tpu.vector_store %arg8[%c0_87, %c6_88, %c0_89, %c0_90], %111 {strides = array<i32>} : memref<1x8x8x4xbf16, #tpu.memory_space<vmem>>, vector<1x1x8x4xbf16>,
    %112 = vector.extract_strided_slice %27 {offsets = [0, 28], sizes = [8, 4], strides = [1, 1]} : vector<8x96xbf16> to vector<8x4xbf16>
    %c0_91 = arith.constant 0 : index
    %c7 = arith.constant 7 : index
    %c0_92 = arith.constant 0 : index
    %c0_93 = arith.constant 0 : index
    %113 = vector.load %arg6[%c0_91, %c7, %c0_92, %c0_93] : memref<1x8x8x4xbf16, #tpu.memory_space<vmem>>, vector<1x1x8x4xbf16>
    %114 = vector.shape_cast %113 : vector<1x1x8x4xbf16> to vector<8x4xbf16>
    %115 = vector.shape_cast %112 : vector<8x4xbf16> to vector<1x1x8x4xbf16>
    tpu.vector_store %arg6[%c0_91, %c7, %c0_92, %c0_93], %115 {strides = array<i32>} : memref<1x8x8x4xbf16, #tpu.memory_space<vmem>>, vector<1x1x8x4xbf16>,
    %116 = vector.extract_strided_slice %27 {offsets = [0, 60], sizes = [8, 4], strides = [1, 1]} : vector<8x96xbf16> to vector<8x4xbf16>
    %c0_94 = arith.constant 0 : index
    %c7_95 = arith.constant 7 : index
    %c0_96 = arith.constant 0 : index
    %c0_97 = arith.constant 0 : index
    %117 = vector.load %arg7[%c0_94, %c7_95, %c0_96, %c0_97] : memref<1x8x8x4xbf16, #tpu.memory_space<vmem>>, vector<1x1x8x4xbf16>
    %118 = vector.shape_cast %117 : vector<1x1x8x4xbf16> to vector<8x4xbf16>
    %119 = vector.shape_cast %116 : vector<8x4xbf16> to vector<1x1x8x4xbf16>
    tpu.vector_store %arg7[%c0_94, %c7_95, %c0_96, %c0_97], %119 {strides = array<i32>} : memref<1x8x8x4xbf16, #tpu.memory_space<vmem>>, vector<1x1x8x4xbf16>,
    %120 = vector.extract_strided_slice %27 {offsets = [0, 92], sizes = [8, 4], strides = [1, 1]} : vector<8x96xbf16> to vector<8x4xbf16>
    %c0_98 = arith.constant 0 : index
    %c7_99 = arith.constant 7 : index
    %c0_100 = arith.constant 0 : index
    %c0_101 = arith.constant 0 : index
    %121 = vector.load %arg8[%c0_98, %c7_99, %c0_100, %c0_101] : memref<1x8x8x4xbf16, #tpu.memory_space<vmem>>, vector<1x1x8x4xbf16>
    %122 = vector.shape_cast %121 : vector<1x1x8x4xbf16> to vector<8x4xbf16>
    %123 = vector.shape_cast %120 : vector<8x4xbf16> to vector<1x1x8x4xbf16>
    tpu.vector_store %arg8[%c0_98, %c7_99, %c0_100, %c0_101], %123 {strides = array<i32>} : memref<1x8x8x4xbf16, #tpu.memory_space<vmem>>, vector<1x1x8x4xbf16>,
    return
  }
  func.func @transform_0(%arg0: i32, %arg1: i32) -> (i32, i32, i32) {
    %c0_i32 = arith.constant 0 : i32
    %c0_i32_0 = arith.constant 0 : i32
    return %arg0, %arg1, %c0_i32 : i32, i32, i32
  }
  func.func @transform_1(%arg0: i32, %arg1: i32) -> (i32, i32) {
    %c0_i32 = arith.constant 0 : i32
    %c0_i32_0 = arith.constant 0 : i32
    %c0_i32_1 = arith.constant 0 : i32
    return %c0_i32, %c0_i32_0 : i32, i32
  }
  func.func @transform_2(%arg0: i32, %arg1: i32) -> (i32, i32) {
    %c0_i32 = arith.constant 0 : i32
    %c0_i32_0 = arith.constant 0 : i32
    %c0_i32_1 = arith.constant 0 : i32
    return %c0_i32, %c0_i32_0 : i32, i32
  }
  func.func @transform_3(%arg0: i32, %arg1: i32) -> (i32, i32) {
    %c0_i32 = arith.constant 0 : i32
    %c0_i32_0 = arith.constant 0 : i32
    %c0_i32_1 = arith.constant 0 : i32
    return %c0_i32, %c0_i32_0 : i32, i32
  }
  func.func @transform_4(%arg0: i32, %arg1: i32) -> (i32, i32, i32, i32) {
    %c0_i32 = arith.constant 0 : i32
    %c0_i32_0 = arith.constant 0 : i32
    %c0_i32_1 = arith.constant 0 : i32
    return %arg0, %c0_i32, %arg1, %c0_i32_0 : i32, i32, i32, i32
  }
  func.func @transform_5(%arg0: i32, %arg1: i32) -> (i32, i32, i32, i32) {
    %c0_i32 = arith.constant 0 : i32
    %c0_i32_0 = arith.constant 0 : i32
    %c0_i32_1 = arith.constant 0 : i32
    return %arg0, %c0_i32, %arg1, %c0_i32_0 : i32, i32, i32, i32
  }
  func.func @transform_6(%arg0: i32, %arg1: i32) -> (i32, i32, i32, i32) {
    %c0_i32 = arith.constant 0 : i32
    %c0_i32_0 = arith.constant 0 : i32
    %c0_i32_1 = arith.constant 0 : i32
    return %arg0, %c0_i32, %arg1, %c0_i32_0 : i32, i32, i32, i32
  }
}

module attributes {stable_mosaic.version = 11 : i64} {
  func.func @ln_qkv_kernel(%arg0: i32, %arg1: i32, %arg2: memref<1x8x32xf32, #tpu.memory_space<vmem>>, %arg3: memref<32x96xbf16, #tpu.memory_space<vmem>>, %arg4: memref<1x32xf32, #tpu.memory_space<vmem>>, %arg5: memref<1x32xf32, #tpu.memory_space<vmem>>, %arg6: memref<1x8x8x4xbf16, #tpu.memory_space<vmem>>, %arg7: memref<1x8x8x4xbf16, #tpu.memory_space<vmem>>, %arg8: memref<1x8x8x4xbf16, #tpu.memory_space<vmem>>) attributes {dimension_semantics = [#tpu.dimension_semantics<parallel>, #tpu.dimension_semantics<parallel>], iteration_bounds = array<i64: 2, 1>, scalar_prefetch = 0 : i64, scratch_operands = 0 : i64, tpu.core_type = #tpu.core_type<tc>, window_params = [{transform_indices = @transform_0, window_bounds = array<i64: 1, 8, 32>}, {pipeline_mode = #tpu.pipeline_mode<synchronous>, transform_indices = @transform_1, window_bounds = array<i64: 32, 96>}, {pipeline_mode = #tpu.pipeline_mode<synchronous>, transform_indices = @transform_2, window_bounds = array<i64: 1, 32>}, {pipeline_mode = #tpu.pipeline_mode<synchronous>, transform_indices = @transform_3, window_bounds = array<i64: 1, 32>}, {transform_indices = @transform_4, window_bounds = array<i64: 1, 8, 8, 4>}, {transform_indices = @transform_5, window_bounds = array<i64: 1, 8, 8, 4>}, {transform_indices = @transform_6, window_bounds = array<i64: 1, 8, 8, 4>}]} {
    %c0 = arith.constant 0 : index
    %c0_0 = arith.constant 0 : index
    %c0_1 = arith.constant 0 : index
    %0 = vector.load %arg2[%c0, %c0_0, %c0_1] : memref<1x8x32xf32, #tpu.memory_space<vmem>>, vector<1x8x32xf32>
    %1 = vector.shape_cast %0 : vector<1x8x32xf32> to vector<8x32xf32>
    %cst = arith.constant dense<0.000000e+00> : vector<8xf32>
    %2 = vector.multi_reduction <add>, %1, %cst [1] : vector<8x32xf32> to vector<8xf32>
    %3 = vector.shape_cast %2 : vector<8xf32> to vector<8x1xf32>
    %cst_2 = arith.constant 3.200000e+01 : f32
    %4 = vector.broadcast %cst_2 : f32 to vector<8x1xf32>
    %5 = arith.divf %3, %4 : vector<8x1xf32>
    %6 = vector.broadcast %5 : vector<8x1xf32> to vector<8x32xf32>
    %7 = arith.subf %1, %6 : vector<8x32xf32>
    %8 = arith.mulf %7, %7 : vector<8x32xf32>
    %cst_3 = arith.constant dense<0.000000e+00> : vector<8xf32>
    %9 = vector.multi_reduction <add>, %8, %cst_3 [1] : vector<8x32xf32> to vector<8xf32>
    %10 = vector.shape_cast %9 : vector<8xf32> to vector<8x1xf32>
    %cst_4 = arith.constant 3.200000e+01 : f32
    %11 = vector.broadcast %cst_4 : f32 to vector<8x1xf32>
    %12 = arith.divf %10, %11 : vector<8x1xf32>
    %cst_5 = arith.constant 9.99999974E-6 : f32
    %13 = vector.broadcast %cst_5 : f32 to vector<8x1xf32>
    %14 = arith.addf %12, %13 : vector<8x1xf32>
    %15 = math.rsqrt %14 : vector<8x1xf32>
    %16 = vector.broadcast %15 : vector<8x1xf32> to vector<8x32xf32>
    %17 = arith.mulf %7, %16 : vector<8x32xf32>
    %c0_6 = arith.constant 0 : index
    %c0_7 = arith.constant 0 : index
    %18 = vector.load %arg4[%c0_6, %c0_7] : memref<1x32xf32, #tpu.memory_space<vmem>>, vector<1x32xf32>
    %19 = vector.broadcast %18 : vector<1x32xf32> to vector<8x32xf32>
    %20 = arith.mulf %17, %19 : vector<8x32xf32>
    %c0_8 = arith.constant 0 : index
    %c0_9 = arith.constant 0 : index
    %21 = vector.load %arg5[%c0_8, %c0_9] : memref<1x32xf32, #tpu.memory_space<vmem>>, vector<1x32xf32>
    %22 = vector.broadcast %21 : vector<1x32xf32> to vector<8x32xf32>
    %23 = arith.addf %20, %22 : vector<8x32xf32>
    %24 = arith.truncf %23 : vector<8x32xf32> to vector<8x32xbf16>
    %c0_10 = arith.constant 0 : index
    %c0_11 = arith.constant 0 : index
    %25 = vector.load %arg3[%c0_10, %c0_11] : memref<32x96xbf16, #tpu.memory_space<vmem>>, vector<32x96xbf16>
    %cst_12 = arith.constant dense<0.000000e+00> : vector<8x96xf32>
    %26 = tpu.matmul %24, %25, %cst_12 {dimension_numbers = #tpu.dot_dimension_numbers<[1], [0], [0], [1], [0, 0, 1, 1], [], []>} : vector<8x32xbf16>, vector<32x96xbf16>, vector<8x96xf32> -> vector<8x96xf32>
    %27 = arith.truncf %26 : vector<8x96xf32> to vector<8x96xbf16>
    %28 = vector.extract_strided_slice %27 {offsets = [0, 0], sizes = [8, 4], strides = [1, 1]} : vector<8x96xbf16> to vector<8x4xbf16>
    %c0_13 = arith.constant 0 : index
    %c0_14 = arith.constant 0 : index
    %c0_15 = arith.constant 0 : index
    %c0_16 = arith.constant 0 : index
    %29 = vector.load %arg6[%c0_13, %c0_14, %c0_15, %c0_16] : memref<1x8x8x4xbf16, #tpu.memory_space<vmem>>, vector<1x1x8x4xbf16>
    %30 = vector.shape_cast %29 : vector<1x1x8x4xbf16> to vector<8x4xbf16>
    %31 = vector.shape_cast %28 : vector<8x4xbf16> to vector<1x1x8x4xbf16>
    tpu.vector_store %arg6[%c0_13, %c0_14, %c0_15, %c0_16], %31 {strides = array<i32>} : memref<1x8x8x4xbf16, #tpu.memory_space<vmem>>, vector<1x1x8x4xbf16>,
    %32 = vector.extract_strided_slice %27 {offsets = [0, 32], sizes = [8, 4], strides = [1, 1]} : vector<8x96xbf16> to vector<8x4xbf16>
    %c0_17 = arith.constant 0 : index
    %c0_18 = arith.constant 0 : index
    %c0_19 = arith.constant 0 : index
    %c0_20 = arith.constant 0 : index
    %33 = vector.load %arg7[%c0_17, %c0_18, %c0_19, %c0_20] : memref<1x8x8x4xbf16, #tpu.memory_space<vmem>>, vector<1x1x8x4xbf16>
    %34 = vector.shape_cast %33 : vector<1x1x8x4xbf16> to vector<8x4xbf16>
    %35 = vector.shape_cast %32 : vector<8x4xbf16> to vector<1x1x8x4xbf16>
    tpu.vector_store %arg7[%c0_17, %c0_18, %c0_19, %c0_20], %35 {strides = array<i32>} : memref<1x8x8x4xbf16, #tpu.memory_space<vmem>>, vector<1x1x8x4xbf16>,
    %36 = vector.extract_strided_slice %27 {offsets = [0, 64], sizes = [8, 4], strides = [1, 1]} : vector<8x96xbf16> to vector<8x4xbf16>
    %c0_21 = arith.constant 0 : index
    %c0_22 = arith.constant 0 : index
    %c0_23 = arith.constant 0 : index
    %c0_24 = arith.constant 0 : index
    %37 = vector.load %arg8[%c0_21, %c0_22, %c0_23, %c0_24] : memref<1x8x8x4xbf16, #tpu.memory_space<vmem>>, vector<1x1x8x4xbf16>
    %38 = vector.shape_cast %37 : vector<1x1x8x4xbf16> to vector<8x4xbf16>
    %39 = vector.shape_cast %36 : vector<8x4xbf16> to vector<1x1x8x4xbf16>
    tpu.vector_store %arg8[%c0_21, %c0_22, %c0_23, %c0_24], %39 {strides = array<i32>} : memref<1x8x8x4xbf16, #tpu.memory_space<vmem>>, vector<1x1x8x4xbf16>,
    %40 = vector.extract_strided_slice %27 {offsets = [0, 4], sizes = [8, 4], strides = [1, 1]} : vector<8x96xbf16> to vector<8x4xbf16>
    %c0_25 = arith.constant 0 : index
    %c1 = arith.constant 1 : index
    %c0_26 = arith.constant 0 : index
    %c0_27 = arith.constant 0 : index
    %41 = vector.load %arg6[%c0_25, %c1, %c0_26, %c0_27] : memref<1x8x8x4xbf16, #tpu.memory_space<vmem>>, vector<1x1x8x4xbf16>
    %42 = vector.shape_cast %41 : vector<1x1x8x4xbf16> to vector<8x4xbf16>
    %43 = vector.shape_cast %40 : vector<8x4xbf16> to vector<1x1x8x4xbf16>
    tpu.vector_store %arg6[%c0_25, %c1, %c0_26, %c0_27], %43 {strides = array<i32>} : memref<1x8x8x4xbf16, #tpu.memory_space<vmem>>, vector<1x1x8x4xbf16>,
    %44 = vector.extract_strided_slice %27 {offsets = [0, 36], sizes = [8, 4], strides = [1, 1]} : vector<8x96xbf16> to vector<8x4xbf16>
    %c0_28 = arith.constant 0 : index
    %c1_29 = arith.constant 1 : index
    %c0_30 = arith.constant 0 : index
    %c0_31 = arith.constant 0 : index
    %45 = vector.load %arg7[%c0_28, %c1_29, %c0_30, %c0_31] : memref<1x8x8x4xbf16, #tpu.memory_space<vmem>>, vector<1x1x8x4xbf16>
    %46 = vector.shape_cast %45 : vector<1x1x8x4xbf16> to vector<8x4xbf16>
    %47 = vector.shape_cast %44 : vector<8x4xbf16> to vector<1x1x8x4xbf16>
    tpu.vector_store %arg7[%c0_28, %c1_29, %c0_30, %c0_31], %47 {strides = array<i32>} : memref<1x8x8x4xbf16, #tpu.memory_space<vmem>>, vector<1x1x8x4xbf16>,
    %48 = vector.extract_strided_slice %27 {offsets = [0, 68], sizes = [8, 4], strides = [1, 1]} : vector<8x96xbf16> to vector<8x4xbf16>
    %c0_32 = arith.constant 0 : index
    %c1_33 = arith.constant 1 : index
    %c0_34 = arith.constant 0 : index
    %c0_35 = arith.constant 0 : index
    %49 = vector.load %arg8[%c0_32, %c1_33, %c0_34, %c0_35] : memref<1x8x8x4xbf16, #tpu.memory_space<vmem>>, vector<1x1x8x4xbf16>
    %50 = vector.shape_cast %49 : vector<1x1x8x4xbf16> to vector<8x4xbf16>
    %51 = vector.shape_cast %48 : vector<8x4xbf16> to vector<1x1x8x4xbf16>
    tpu.vector_store %arg8[%c0_32, %c1_33, %c0_34, %c0_35], %51 {strides = array<i32>} : memref<1x8x8x4xbf16, #tpu.memory_space<vmem>>, vector<1x1x8x4xbf16>,
    %52 = vector.extract_strided_slice %27 {offsets = [0, 8], sizes = [8, 4], strides = [1, 1]} : vector<8x96xbf16> to vector<8x4xbf16>
    %c0_36 = arith.constant 0 : index
    %c2 = arith.constant 2 : index
    %c0_37 = arith.constant 0 : index
    %c0_38 = arith.constant 0 : index
    %53 = vector.load %arg6[%c0_36, %c2, %c0_37, %c0_38] : memref<1x8x8x4xbf16, #tpu.memory_space<vmem>>, vector<1x1x8x4xbf16>
    %54 = vector.shape_cast %53 : vector<1x1x8x4xbf16> to vector<8x4xbf16>
    %55 = vector.shape_cast %52 : vector<8x4xbf16> to vector<1x1x8x4xbf16>
    tpu.vector_store %arg6[%c0_36, %c2, %c0_37, %c0_38], %55 {strides = array<i32>} : memref<1x8x8x4xbf16, #tpu.memory_space<vmem>>, vector<1x1x8x4xbf16>,
    %56 = vector.extract_strided_slice %27 {offsets = [0, 40], sizes = [8, 4], strides = [1, 1]} : vector<8x96xbf16> to vector<8x4xbf16>
    %c0_39 = arith.constant 0 : index
    %c2_40 = arith.constant 2 : index
    %c0_41 = arith.constant 0 : index
    %c0_42 = arith.constant 0 : index
    %57 = vector.load %arg7[%c0_39, %c2_40, %c0_41, %c0_42] : memref<1x8x8x4xbf16, #tpu.memory_space<vmem>>, vector<1x1x8x4xbf16>
    %58 = vector.shape_cast %57 : vector<1x1x8x4xbf16> to vector<8x4xbf16>
    %59 = vector.shape_cast %56 : vector<8x4xbf16> to vector<1x1x8x4xbf16>
    tpu.vector_store %arg7[%c0_39, %c2_40, %c0_41, %c0_42], %59 {strides = array<i32>} : memref<1x8x8x4xbf16, #tpu.memory_space<vmem>>, vector<1x1x8x4xbf16>,
    %60 = vector.extract_strided_slice %27 {offsets = [0, 72], sizes = [8, 4], strides = [1, 1]} : vector<8x96xbf16> to vector<8x4xbf16>
    %c0_43 = arith.constant 0 : index
    %c2_44 = arith.constant 2 : index
    %c0_45 = arith.constant 0 : index
    %c0_46 = arith.constant 0 : index
    %61 = vector.load %arg8[%c0_43, %c2_44, %c0_45, %c0_46] : memref<1x8x8x4xbf16, #tpu.memory_space<vmem>>, vector<1x1x8x4xbf16>
    %62 = vector.shape_cast %61 : vector<1x1x8x4xbf16> to vector<8x4xbf16>
    %63 = vector.shape_cast %60 : vector<8x4xbf16> to vector<1x1x8x4xbf16>
    tpu.vector_store %arg8[%c0_43, %c2_44, %c0_45, %c0_46], %63 {strides = array<i32>} : memref<1x8x8x4xbf16, #tpu.memory_space<vmem>>, vector<1x1x8x4xbf16>,
    %64 = vector.extract_strided_slice %27 {offsets = [0, 12], sizes = [8, 4], strides = [1, 1]} : vector<8x96xbf16> to vector<8x4xbf16>
    %c0_47 = arith.constant 0 : index
    %c3 = arith.constant 3 : index
    %c0_48 = arith.constant 0 : index
    %c0_49 = arith.constant 0 : index
    %65 = vector.load %arg6[%c0_47, %c3, %c0_48, %c0_49] : memref<1x8x8x4xbf16, #tpu.memory_space<vmem>>, vector<1x1x8x4xbf16>
    %66 = vector.shape_cast %65 : vector<1x1x8x4xbf16> to vector<8x4xbf16>
    %67 = vector.shape_cast %64 : vector<8x4xbf16> to vector<1x1x8x4xbf16>
    tpu.vector_store %arg6[%c0_47, %c3, %c0_48, %c0_49], %67 {strides = array<i32>} : memref<1x8x8x4xbf16, #tpu.memory_space<vmem>>, vector<1x1x8x4xbf16>,
    %68 = vector.extract_strided_slice %27 {offsets = [0, 44], sizes = [8, 4], strides = [1, 1]} : vector<8x96xbf16> to vector<8x4xbf16>
    %c0_50 = arith.constant 0 : index
    %c3_51 = arith.constant 3 : index
    %c0_52 = arith.constant 0 : index
    %c0_53 = arith.constant 0 : index
    %69 = vector.load %arg7[%c0_50, %c3_51, %c0_52, %c0_53] : memref<1x8x8x4xbf16, #tpu.memory_space<vmem>>, vector<1x1x8x4xbf16>
    %70 = vector.shape_cast %69 : vector<1x1x8x4xbf16> to vector<8x4xbf16>
    %71 = vector.shape_cast %68 : vector<8x4xbf16> to vector<1x1x8x4xbf16>
    tpu.vector_store %arg7[%c0_50, %c3_51, %c0_52, %c0_53], %71 {strides = array<i32>} : memref<1x8x8x4xbf16, #tpu.memory_space<vmem>>, vector<1x1x8x4xbf16>,
    %72 = vector.extract_strided_slice %27 {offsets = [0, 76], sizes = [8, 4], strides = [1, 1]} : vector<8x96xbf16> to vector<8x4xbf16>
    %c0_54 = arith.constant 0 : index
    %c3_55 = arith.constant 3 : index
    %c0_56 = arith.constant 0 : index
    %c0_57 = arith.constant 0 : index
    %73 = vector.load %arg8[%c0_54, %c3_55, %c0_56, %c0_57] : memref<1x8x8x4xbf16, #tpu.memory_space<vmem>>, vector<1x1x8x4xbf16>
    %74 = vector.shape_cast %73 : vector<1x1x8x4xbf16> to vector<8x4xbf16>
    %75 = vector.shape_cast %72 : vector<8x4xbf16> to vector<1x1x8x4xbf16>
    tpu.vector_store %arg8[%c0_54, %c3_55, %c0_56, %c0_57], %75 {strides = array<i32>} : memref<1x8x8x4xbf16, #tpu.memory_space<vmem>>, vector<1x1x8x4xbf16>,
    %76 = vector.extract_strided_slice %27 {offsets = [0, 16], sizes = [8, 4], strides = [1, 1]} : vector<8x96xbf16> to vector<8x4xbf16>
    %c0_58 = arith.constant 0 : index
    %c4 = arith.constant 4 : index
    %c0_59 = arith.constant 0 : index
    %c0_60 = arith.constant 0 : index
    %77 = vector.load %arg6[%c0_58, %c4, %c0_59, %c0_60] : memref<1x8x8x4xbf16, #tpu.memory_space<vmem>>, vector<1x1x8x4xbf16>
    %78 = vector.shape_cast %77 : vector<1x1x8x4xbf16> to vector<8x4xbf16>
    %79 = vector.shape_cast %76 : vector<8x4xbf16> to vector<1x1x8x4xbf16>
    tpu.vector_store %arg6[%c0_58, %c4, %c0_59, %c0_60], %79 {strides = array<i32>} : memref<1x8x8x4xbf16, #tpu.memory_space<vmem>>, vector<1x1x8x4xbf16>,
    %80 = vector.extract_strided_slice %27 {offsets = [0, 48], sizes = [8, 4], strides = [1, 1]} : vector<8x96xbf16> to vector<8x4xbf16>
    %c0_61 = arith.constant 0 : index
    %c4_62 = arith.constant 4 : index
    %c0_63 = arith.constant 0 : index
    %c0_64 = arith.constant 0 : index
    %81 = vector.load %arg7[%c0_61, %c4_62, %c0_63, %c0_64] : memref<1x8x8x4xbf16, #tpu.memory_space<vmem>>, vector<1x1x8x4xbf16>
    %82 = vector.shape_cast %81 : vector<1x1x8x4xbf16> to vector<8x4xbf16>
    %83 = vector.shape_cast %80 : vector<8x4xbf16> to vector<1x1x8x4xbf16>
    tpu.vector_store %arg7[%c0_61, %c4_62, %c0_63, %c0_64], %83 {strides = array<i32>} : memref<1x8x8x4xbf16, #tpu.memory_space<vmem>>, vector<1x1x8x4xbf16>,
    %84 = vector.extract_strided_slice %27 {offsets = [0, 80], sizes = [8, 4], strides = [1, 1]} : vector<8x96xbf16> to vector<8x4xbf16>
    %c0_65 = arith.constant 0 : index
    %c4_66 = arith.constant 4 : index
    %c0_67 = arith.constant 0 : index
    %c0_68 = arith.constant 0 : index
    %85 = vector.load %arg8[%c0_65, %c4_66, %c0_67, %c0_68] : memref<1x8x8x4xbf16, #tpu.memory_space<vmem>>, vector<1x1x8x4xbf16>
    %86 = vector.shape_cast %85 : vector<1x1x8x4xbf16> to vector<8x4xbf16>
    %87 = vector.shape_cast %84 : vector<8x4xbf16> to vector<1x1x8x4xbf16>
    tpu.vector_store %arg8[%c0_65, %c4_66, %c0_67, %c0_68], %87 {strides = array<i32>} : memref<1x8x8x4xbf16, #tpu.memory_space<vmem>>, vector<1x1x8x4xbf16>,
    %88 = vector.extract_strided_slice %27 {offsets = [0, 20], sizes = [8, 4], strides = [1, 1]} : vector<8x96xbf16> to vector<8x4xbf16>
    %c0_69 = arith.constant 0 : index
    %c5 = arith.constant 5 : index
    %c0_70 = arith.constant 0 : index
    %c0_71 = arith.constant 0 : index
    %89 = vector.load %arg6[%c0_69, %c5, %c0_70, %c0_71] : memref<1x8x8x4xbf16, #tpu.memory_space<vmem>>, vector<1x1x8x4xbf16>
    %90 = vector.shape_cast %89 : vector<1x1x8x4xbf16> to vector<8x4xbf16>
    %91 = vector.shape_cast %88 : vector<8x4xbf16> to vector<1x1x8x4xbf16>
    tpu.vector_store %arg6[%c0_69, %c5, %c0_70, %c0_71], %91 {strides = array<i32>} : memref<1x8x8x4xbf16, #tpu.memory_space<vmem>>, vector<1x1x8x4xbf16>,
    %92 = vector.extract_strided_slice %27 {offsets = [0, 52], sizes = [8, 4], strides = [1, 1]} : vector<8x96xbf16> to vector<8x4xbf16>
    %c0_72 = arith.constant 0 : index
    %c5_73 = arith.constant 5 : index
    %c0_74 = arith.constant 0 : index
    %c0_75 = arith.constant 0 : index
    %93 = vector.load %arg7[%c0_72, %c5_73, %c0_74, %c0_75] : memref<1x8x8x4xbf16, #tpu.memory_space<vmem>>, vector<1x1x8x4xbf16>
    %94 = vector.shape_cast %93 : vector<1x1x8x4xbf16> to vector<8x4xbf16>
    %95 = vector.shape_cast %92 : vector<8x4xbf16> to vector<1x1x8x4xbf16>
    tpu.vector_store %arg7[%c0_72, %c5_73, %c0_74, %c0_75], %95 {strides = array<i32>} : memref<1x8x8x4xbf16, #tpu.memory_space<vmem>>, vector<1x1x8x4xbf16>,
    %96 = vector.extract_strided_slice %27 {offsets = [0, 84], sizes = [8, 4], strides = [1, 1]} : vector<8x96xbf16> to vector<8x4xbf16>
    %c0_76 = arith.constant 0 : index
    %c5_77 = arith.constant 5 : index
    %c0_78 = arith.constant 0 : index
    %c0_79 = arith.constant 0 : index
    %97 = vector.load %arg8[%c0_76, %c5_77, %c0_78, %c0_79] : memref<1x8x8x4xbf16, #tpu.memory_space<vmem>>, vector<1x1x8x4xbf16>
    %98 = vector.shape_cast %97 : vector<1x1x8x4xbf16> to vector<8x4xbf16>
    %99 = vector.shape_cast %96 : vector<8x4xbf16> to vector<1x1x8x4xbf16>
    tpu.vector_store %arg8[%c0_76, %c5_77, %c0_78, %c0_79], %99 {strides = array<i32>} : memref<1x8x8x4xbf16, #tpu.memory_space<vmem>>, vector<1x1x8x4xbf16>,
    %100 = vector.extract_strided_slice %27 {offsets = [0, 24], sizes = [8, 4], strides = [1, 1]} : vector<8x96xbf16> to vector<8x4xbf16>
    %c0_80 = arith.constant 0 : index
    %c6 = arith.constant 6 : index
    %c0_81 = arith.constant 0 : index
    %c0_82 = arith.constant 0 : index
    %101 = vector.load %arg6[%c0_80, %c6, %c0_81, %c0_82] : memref<1x8x8x4xbf16, #tpu.memory_space<vmem>>, vector<1x1x8x4xbf16>
    %102 = vector.shape_cast %101 : vector<1x1x8x4xbf16> to vector<8x4xbf16>
    %103 = vector.shape_cast %100 : vector<8x4xbf16> to vector<1x1x8x4xbf16>
    tpu.vector_store %arg6[%c0_80, %c6, %c0_81, %c0_82], %103 {strides = array<i32>} : memref<1x8x8x4xbf16, #tpu.memory_space<vmem>>, vector<1x1x8x4xbf16>,
    %104 = vector.extract_strided_slice %27 {offsets = [0, 56], sizes = [8, 4], strides = [1, 1]} : vector<8x96xbf16> to vector<8x4xbf16>
    %c0_83 = arith.constant 0 : index
    %c6_84 = arith.constant 6 : index
    %c0_85 = arith.constant 0 : index
    %c0_86 = arith.constant 0 : index
    %105 = vector.load %arg7[%c0_83, %c6_84, %c0_85, %c0_86] : memref<1x8x8x4xbf16, #tpu.memory_space<vmem>>, vector<1x1x8x4xbf16>
    %106 = vector.shape_cast %105 : vector<1x1x8x4xbf16> to vector<8x4xbf16>
    %107 = vector.shape_cast %104 : vector<8x4xbf16> to vector<1x1x8x4xbf16>
    tpu.vector_store %arg7[%c0_83, %c6_84, %c0_85, %c0_86], %107 {strides = array<i32>} : memref<1x8x8x4xbf16, #tpu.memory_space<vmem>>, vector<1x1x8x4xbf16>,
    %108 = vector.extract_strided_slice %27 {offsets = [0, 88], sizes = [8, 4], strides = [1, 1]} : vector<8x96xbf16> to vector<8x4xbf16>
    %c0_87 = arith.constant 0 : index
    %c6_88 = arith.constant 6 : index
    %c0_89 = arith.constant 0 : index
    %c0_90 = arith.constant 0 : index
    %109 = vector.load %arg8[%c0_87, %c6_88, %c0_89, %c0_90] : memref<1x8x8x4xbf16, #tpu.memory_space<vmem>>, vector<1x1x8x4xbf16>
    %110 = vector.shape_cast %109 : vector<1x1x8x4xbf16> to vector<8x4xbf16>
    %111 = vector.shape_cast %108 : vector<8x4xbf16> to vector<1x1x8x4xbf16>
    tpu.vector_store %arg8[%c0_87, %c6_88, %c0_89, %c0_90], %111 {strides = array<i32>} : memref<1x8x8x4xbf16, #tpu.memory_space<vmem>>, vector<1x1x8x4xbf16>,
    %112 = vector.extract_strided_slice %27 {offsets = [0, 28], sizes = [8, 4], strides = [1, 1]} : vector<8x96xbf16> to vector<8x4xbf16>
    %c0_91 = arith.constant 0 : index
    %c7 = arith.constant 7 : index
    %c0_92 = arith.constant 0 : index
    %c0_93 = arith.constant 0 : index
    %113 = vector.load %arg6[%c0_91, %c7, %c0_92, %c0_93] : memref<1x8x8x4xbf16, #tpu.memory_space<vmem>>, vector<1x1x8x4xbf16>
    %114 = vector.shape_cast %113 : vector<1x1x8x4xbf16> to vector<8x4xbf16>
    %115 = vector.shape_cast %112 : vector<8x4xbf16> to vector<1x1x8x4xbf16>
    tpu.vector_store %arg6[%c0_91, %c7, %c0_92, %c0_93], %115 {strides = array<i32>} : memref<1x8x8x4xbf16, #tpu.memory_space<vmem>>, vector<1x1x8x4xbf16>,
    %116 = vector.extract_strided_slice %27 {offsets = [0, 60], sizes = [8, 4], strides = [1, 1]} : vector<8x96xbf16> to vector<8x4xbf16>
    %c0_94 = arith.constant 0 : index
    %c7_95 = arith.constant 7 : index
    %c0_96 = arith.constant 0 : index
    %c0_97 = arith.constant 0 : index
    %117 = vector.load %arg7[%c0_94, %c7_95, %c0_96, %c0_97] : memref<1x8x8x4xbf16, #tpu.memory_space<vmem>>, vector<1x1x8x4xbf16>
    %118 = vector.shape_cast %117 : vector<1x1x8x4xbf16> to vector<8x4xbf16>
    %119 = vector.shape_cast %116 : vector<8x4xbf16> to vector<1x1x8x4xbf16>
    tpu.vector_store %arg7[%c0_94, %c7_95, %c0_96, %c0_97], %119 {strides = array<i32>} : memref<1x8x8x4xbf16, #tpu.memory_space<vmem>>, vector<1x1x8x4xbf16>,
    %120 = vector.extract_strided_slice %27 {offsets = [0, 92], sizes = [8, 4], strides = [1, 1]} : vector<8x96xbf16> to vector<8x4xbf16>
    %c0_98 = arith.constant 0 : index
    %c7_99 = arith.constant 7 : index
    %c0_100 = arith.constant 0 : index
    %c0_101 = arith.constant 0 : index
    %121 = vector.load %arg8[%c0_98, %c7_99, %c0_100, %c0_101] : memref<1x8x8x4xbf16, #tpu.memory_space<vmem>>, vector<1x1x8x4xbf16>
    %122 = vector.shape_cast %121 : vector<1x1x8x4xbf16> to vector<8x4xbf16>
    %123 = vector.shape_cast %120 : vector<8x4xbf16> to vector<1x1x8x4xbf16>
    tpu.vector_store %arg8[%c0_98, %c7_99, %c0_100, %c0_101], %123 {strides = array<i32>} : memref<1x8x8x4xbf16, #tpu.memory_space<vmem>>, vector<1x1x8x4xbf16>,
    return
  }
  func.func @transform_0(%arg0: i32, %arg1: i32) -> (i32, i32, i32) {
    %c0_i32 = arith.constant 0 : i32
    %c0_i32_0 = arith.constant 0 : i32
    return %arg0, %arg1, %c0_i32 : i32, i32, i32
  }
  func.func @transform_1(%arg0: i32, %arg1: i32) -> (i32, i32) {
    %c0_i32 = arith.constant 0 : i32
    %c0_i32_0 = arith.constant 0 : i32
    %c0_i32_1 = arith.constant 0 : i32
    return %c0_i32, %c0_i32_0 : i32, i32
  }
  func.func @transform_2(%arg0: i32, %arg1: i32) -> (i32, i32) {
    %c0_i32 = arith.constant 0 : i32
    %c0_i32_0 = arith.constant 0 : i32
    %c0_i32_1 = arith.constant 0 : i32
    return %c0_i32, %c0_i32_0 : i32, i32
  }
  func.func @transform_3(%arg0: i32, %arg1: i32) -> (i32, i32) {
    %c0_i32 = arith.constant 0 : i32
    %c0_i32_0 = arith.constant 0 : i32
    %c0_i32_1 = arith.constant 0 : i32
    return %c0_i32, %c0_i32_0 : i32, i32
  }
  func.func @transform_4(%arg0: i32, %arg1: i32) -> (i32, i32, i32, i32) {
    %c0_i32 = arith.constant 0 : i32
    %c0_i32_0 = arith.constant 0 : i32
    %c0_i32_1 = arith.constant 0 : i32
    return %arg0, %c0_i32, %arg1, %c0_i32_0 : i32, i32, i32, i32
  }
  func.func @transform_5(%arg0: i32, %arg1: i32) -> (i32, i32, i32, i32) {
    %c0_i32 = arith.constant 0 : i32
    %c0_i32_0 = arith.constant 0 : i32
    %c0_i32_1 = arith.constant 0 : i32
    return %arg0, %c0_i32, %arg1, %c0_i32_0 : i32, i32, i32, i32
  }
  func.func @transform_6(%arg0: i32, %arg1: i32) -> (i32, i32, i32, i32) {
    %c0_i32 = arith.constant 0 : i32
    %c0_i32_0 = arith.constant 0 : i32
    %c0_i32_1 = arith.constant 0 : i32
    return %arg0, %c0_i32, %arg1, %c0_i32_0 : i32, i32, i32, i32
  }
}

</mosaic_0001>

<llo_original>
// kernel: tpu_custom_call.1
$region0: #{tpu_custom_call.1}
  #allocation0 [shape = 'u32[]', space=smem, size = 0x4, offset = 0x4, fixed_abs, tag = 'smem constant byte address 0x4 - core index']
  #allocation1 [shape = 'u32[144,128]{1,0:T(1,128)}', space=vmem, size = 0x12000, scoped, tag = 'internal scratch']
  %s0 = inlined_call_operand.hbm [shape: f32[2,8,32], index: 0, kind: input, shape index: {}]
  %s1 = inlined_call_operand.hbm [shape: bf16[32,96], index: 1, kind: input, shape index: {}]
  %s2 = inlined_call_operand.vmem [shape: f32[1,32], index: 2, kind: input, shape index: {}]
  %s3 = inlined_call_operand.vmem [shape: f32[1,32], index: 3, kind: input, shape index: {}]
  %s4 = inlined_call_operand.vmem [shape: bf16[2,8,8,4], index: 4, kind: output, shape index: {0}]
  %s5 = inlined_call_operand.vmem [shape: bf16[2,8,8,4], index: 5, kind: output, shape index: {1}]
  %s6 = inlined_call_operand.vmem [shape: bf16[2,8,8,4], index: 6, kind: output, shape index: {2}]
  %7 = xla_tuple %s4, %s5, %s6
  %s8 = sld [smem:[#allocation0]]
  $region73: #{tpu_custom_call.1} parent=0
    _
  %s10 = ssub.s32 1, %s8
  %s11 = scalar_select 0, %s10, %s8
  $region1: #{tpu_custom_call.1} parent=0
    #allocation2 [shape = 'u8[8192]{0}', space=vmem, size = 0x2000, scoped, tag = 'input window, operand 0']
    #allocation3 [shape = 's32[2]{0}', space=sflag, size = 0x8, scoped, tag = 'scoped memory for tpu_custom_call.1']
    #allocation4 [shape = 'u8[8192]{0}', space=vmem, size = 0x2000, scoped, tag = 'input window, operand 1, single buffered']
    #allocation5 [shape = 's32[1]{0}', space=sflag, size = 0x4, scoped, tag = 'scoped memory for tpu_custom_call.1']
    %12 = vsyncpa [#allocation3], 0
    %s13 = scalar_lea.sflag [#allocation3], 1
    %14 = vsyncpa %s13, 0
    %15 = vsyncpa [#allocation5], 0
    loop: start=0, step=1, limit=4
    $region2: #{tpu_custom_call.1} parent=1 // loop_pre_header
      _
    $region3: #{tpu_custom_call.1} parent=1 // loop_header
      %s17 = sphi 0, %s21
      %p18 = scmp.ge.s32.totalorder %s17, 4
      %s24 = sphi 0, %s36
      %s25 = sphi 0, %s32
      %s26 = sphi 0, %s24
      %s27 = sphi 0, %s25
      %s28 = sphi 0, %s26
      %s29 = sphi 0, %s27
      %s41 = sphi 0, %s43
      %s44 = sphi 0, %s41
      %s45 = sphi 0, %s44
      %s61 = sphi 0, %s45
      %s65 = sphi 0, %s65
      %s67 = sphi 0, %s65
      %s68 = sphi 0, %s67
      %s82 = sphi 0, %s68
      %s86 = sphi 0, %s86
      %s88 = sphi 0, %s86
      %s89 = sphi 0, %s88
      %s103 = sphi 0, %s89
      %s107 = sphi 0, %s107
      %s109 = sphi 0, %s107
      %s110 = sphi 0, %s109
      %s124 = sphi 0, %s110
      %s132 = sphi 0, %s134
      %s135 = sphi 0, %s132
      %s136 = sphi 0, %s135
      %s152 = sphi 0, %s136
      %s160 = sphi 0, %s162
      %s163 = sphi 0, %s160
      %s164 = sphi 0, %s163
      %s180 = sphi 0, %s164
      %s188 = sphi 0, %s190
      %s191 = sphi 0, %s188
      %s192 = sphi 0, %s191
      %s208 = sphi 0, %s192
    $region4: #{tpu_custom_call.1} parent=1 // loop_header_branch
      %20 = sbr.rel (%p18) target = $region8
    $region5: #{tpu_custom_call.1} parent=1 // loop_body
      %s22 = ssub.s32 %s17, 1
      %s23 = ssub.s32 %s17, 2
      %s30 = sadd.s32 1, %s25
      %p31 = scmp.ge.s32.totalorder %s30, 1
      %s32 = scalar_select %p31, 0, %s30
      %s33 = sadd.s32 1, %s24
      %s34 = scalar_select %p31, %s33, %s24
      %p35 = scmp.ge.s32.totalorder %s34, 2
      %s36 = scalar_select %p35, 0, %s34
      %s37 = ssub.s32 %s24, %s36
      %s38 = ssub.s32 %s25, %s32
      %s39 = sor.u32 %s37, %s38
      %p40 = scmp.eq.s32.totalorder %s39, 0
      %s42 = sadd.s32 %s41, 1
      %s43 = scalar_select %p40, %s41, %s42
      %p46 = pneg %p40
      %p47 = scmp.eq.s32.totalorder %s17, 1
      %p48 = por %p46, %p47
      %p49 = scmp.ne.s32.totalorder %s41, %s44
      %p50 = scmp.eq.s32.totalorder %s17, 0
      %p51 = por %p49, %p50
      %p52 = scmp.ne.s32.totalorder %s41, %s44
      %p53 = scmp.eq.s32.totalorder %s22, 1
      %p54 = por %p52, %p53
      %p55 = scmp.ne.s32.totalorder %s44, %s45
      %p56 = scmp.eq.s32.totalorder %s22, 0
      %p57 = por %p55, %p56
      %p58 = scmp.ne.s32.totalorder %s44, %s45
      %p59 = scmp.eq.s32.totalorder %s23, 1
      %p60 = por %p58, %p59
      %p62 = scmp.ne.s32.totalorder %s45, %s61
      %p63 = scmp.eq.s32.totalorder %s23, 0
      %p64 = por %p62, %p63
      %s66 = sadd.s32 %s65, 1
      %p69 = scmp.eq.s32.totalorder %s17, 1
      %p70 = scmp.ne.s32.totalorder %s65, %s67
      %p71 = scmp.eq.s32.totalorder %s17, 0
      %p72 = por %p70, %p71
      %p73 = scmp.ne.s32.totalorder %s65, %s67
      %p74 = scmp.eq.s32.totalorder %s22, 1
      %p75 = por %p73, %p74
      %p76 = scmp.ne.s32.totalorder %s67, %s68
      %p77 = scmp.eq.s32.totalorder %s22, 0
      %p78 = por %p76, %p77
      %p79 = scmp.ne.s32.totalorder %s67, %s68
      %p80 = scmp.eq.s32.totalorder %s23, 1
      %p81 = por %p79, %p80
      %p83 = scmp.ne.s32.totalorder %s68, %s82
      %p84 = scmp.eq.s32.totalorder %s23, 0
      %p85 = por %p83, %p84
      %s87 = sadd.s32 %s86, 1
      %p90 = scmp.eq.s32.totalorder %s17, 1
      %p91 = scmp.ne.s32.totalorder %s86, %s88
      %p92 = scmp.eq.s32.totalorder %s17, 0
      %p93 = por %p91, %p92
      %p94 = scmp.ne.s32.totalorder %s86, %s88
      %p95 = scmp.eq.s32.totalorder %s22, 1
      %p96 = por %p94, %p95
      %p97 = scmp.ne.s32.totalorder %s88, %s89
      %p98 = scmp.eq.s32.totalorder %s22, 0
      %p99 = por %p97, %p98
      %p100 = scmp.ne.s32.totalorder %s88, %s89
      %p101 = scmp.eq.s32.totalorder %s23, 1
      %p102 = por %p100, %p101
      %p104 = scmp.ne.s32.totalorder %s89, %s103
      %p105 = scmp.eq.s32.totalorder %s23, 0
      %p106 = por %p104, %p105
      %s108 = sadd.s32 %s107, 1
      %p111 = scmp.eq.s32.totalorder %s17, 1
      %p112 = scmp.ne.s32.totalorder %s107, %s109
      %p113 = scmp.eq.s32.totalorder %s17, 0
      %p114 = por %p112, %p113
      %p115 = scmp.ne.s32.totalorder %s107, %s109
      %p116 = scmp.eq.s32.totalorder %s22, 1
      %p117 = por %p115, %p116
      %p118 = scmp.ne.s32.totalorder %s109, %s110
      %p119 = scmp.eq.s32.totalorder %s22, 0
      %p120 = por %p118, %p119
      %p121 = scmp.ne.s32.totalorder %s109, %s110
      %p122 = scmp.eq.s32.totalorder %s23, 1
      %p123 = por %p121, %p122
      %p125 = scmp.ne.s32.totalorder %s110, %s124
      %p126 = scmp.eq.s32.totalorder %s23, 0
      %p127 = por %p125, %p126
      %s128 = ssub.s32 %s24, %s36
      %s129 = ssub.s32 %s25, %s32
      %s130 = sor.u32 %s128, %s129
      %p131 = scmp.eq.s32.totalorder %s130, 0
      %s133 = sadd.s32 %s132, 1
      %s134 = scalar_select %p131, %s132, %s133
      %p137 = pneg %p131
      %p138 = scmp.eq.s32.totalorder %s17, 1
      %p139 = por %p137, %p138
      %p140 = scmp.ne.s32.totalorder %s132, %s135
      %p141 = scmp.eq.s32.totalorder %s17, 0
      %p142 = por %p140, %p141
      %p143 = scmp.ne.s32.totalorder %s132, %s135
      %p144 = scmp.eq.s32.totalorder %s22, 1
      %p145 = por %p143, %p144
      %p146 = scmp.ne.s32.totalorder %s135, %s136
      %p147 = scmp.eq.s32.totalorder %s22, 0
      %p148 = por %p146, %p147
      %p149 = scmp.ne.s32.totalorder %s135, %s136
      %p150 = scmp.eq.s32.totalorder %s23, 1
      %p151 = por %p149, %p150
      %p153 = scmp.ne.s32.totalorder %s136, %s152
      %p154 = scmp.eq.s32.totalorder %s23, 0
      %p155 = por %p153, %p154
      %s156 = ssub.s32 %s24, %s36
      %s157 = ssub.s32 %s25, %s32
      %s158 = sor.u32 %s156, %s157
      %p159 = scmp.eq.s32.totalorder %s158, 0
      %s161 = sadd.s32 %s160, 1
      %s162 = scalar_select %p159, %s160, %s161
      %p165 = pneg %p159
      %p166 = scmp.eq.s32.totalorder %s17, 1
      %p167 = por %p165, %p166
      %p168 = scmp.ne.s32.totalorder %s160, %s163
      %p169 = scmp.eq.s32.totalorder %s17, 0
      %p170 = por %p168, %p169
      %p171 = scmp.ne.s32.totalorder %s160, %s163
      %p172 = scmp.eq.s32.totalorder %s22, 1
      %p173 = por %p171, %p172
      %p174 = scmp.ne.s32.totalorder %s163, %s164
      %p175 = scmp.eq.s32.totalorder %s22, 0
      %p176 = por %p174, %p175
      %p177 = scmp.ne.s32.totalorder %s163, %s164
      %p178 = scmp.eq.s32.totalorder %s23, 1
      %p179 = por %p177, %p178
      %p181 = scmp.ne.s32.totalorder %s164, %s180
      %p182 = scmp.eq.s32.totalorder %s23, 0
      %p183 = por %p181, %p182
      %s184 = ssub.s32 %s24, %s36
      %s185 = ssub.s32 %s25, %s32
      %s186 = sor.u32 %s184, %s185
      %p187 = scmp.eq.s32.totalorder %s186, 0
      %s189 = sadd.s32 %s188, 1
      %s190 = scalar_select %p187, %s188, %s189
      %p193 = pneg %p187
      %p194 = scmp.eq.s32.totalorder %s17, 1
      %p195 = por %p193, %p194
      %p196 = scmp.ne.s32.totalorder %s188, %s191
      %p197 = scmp.eq.s32.totalorder %s17, 0
      %p198 = por %p196, %p197
      %p199 = scmp.ne.s32.totalorder %s188, %s191
      %p200 = scmp.eq.s32.totalorder %s22, 1
      %p201 = por %p199, %p200
      %p202 = scmp.ne.s32.totalorder %s191, %s192
      %p203 = scmp.eq.s32.totalorder %s22, 0
      %p204 = por %p202, %p203
      %p205 = scmp.ne.s32.totalorder %s191, %s192
      %p206 = scmp.eq.s32.totalorder %s23, 1
      %p207 = por %p205, %p206
      %p209 = scmp.ne.s32.totalorder %s192, %s208
      %p210 = scmp.eq.s32.totalorder %s23, 0
      %p211 = por %p209, %p210
      %p212 = scmp.le.s32.totalorder 1, %s17
      %p213 = scmp.lt.s32.totalorder %s17, 3
      %p214 = pnand %p212, %p213
      %p215 = pneg %p214
      // Predicated region
      $region9: #{tpu_custom_call.1} parent=5 // pred_check
        _
      $region10: #{tpu_custom_call.1} parent=5 // pred_check_branch
        %217 = sbr.rel (%p214) target = $region12
      $region11: #{tpu_custom_call.1} parent=5 // pred_region
        %s218 = ssub.s32 %s17, 1
        // Predicated region
        $region13: #{tpu_custom_call.1} parent=11 // pred_check
          %p219 = pneg %p78
        $region14: #{tpu_custom_call.1} parent=11 // pred_check_branch
          %221 = sbr.rel (%p219) target = $region16
        $region15: #{tpu_custom_call.1} parent=11 // pred_region
          %s223 = ssub.s32 256, 256
          %224 = vsyncadd [#allocation5], %s223
          %s225 = sshll.u32 [#allocation4], 4
          %s226 = int_to_ptr.vmem [resolvable:$true] %s225
          %231 = dma.hbm_to_vmem [thread:$0]  %s1, 256, %s226, [#allocation5], 64, 64, 4
        $region16: #{tpu_custom_call.1} parent=11 // pred_fallthru
          _
        // Predicated region
        $region17: #{tpu_custom_call.1} parent=11 // pred_check
          %p232 = pneg %p99
        $region18: #{tpu_custom_call.1} parent=11 // pred_check_branch
          %234 = sbr.rel (%p232) target = $region20
        $region19: #{tpu_custom_call.1} parent=11 // pred_region
          _
        $region20: #{tpu_custom_call.1} parent=11 // pred_fallthru
          _
        // Predicated region
        $region21: #{tpu_custom_call.1} parent=11 // pred_check
          %p235 = pneg %p120
        $region22: #{tpu_custom_call.1} parent=11 // pred_check_branch
          %237 = sbr.rel (%p235) target = $region24
        $region23: #{tpu_custom_call.1} parent=11 // pred_region
          _
        $region24: #{tpu_custom_call.1} parent=11 // pred_fallthru
          _
      $region12: #{tpu_custom_call.1} parent=5 // pred_fallthru
        _
      %p238 = scmp.lt.s32.totalorder %s17, 2
      // Predicated region
      $region25: #{tpu_custom_call.1} parent=5 // pred_check
        %p239 = pneg %p238
      $region26: #{tpu_custom_call.1} parent=5 // pred_check_branch
        %241 = sbr.rel (%p239) target = $region28
      $region27: #{tpu_custom_call.1} parent=5 // pred_region
        // Predicated region
        $region29: #{tpu_custom_call.1} parent=27 // pred_check
          %p242 = pneg %p51
        $region30: #{tpu_custom_call.1} parent=27 // pred_check_branch
          %244 = sbr.rel (%p242) target = $region32
        $region31: #{tpu_custom_call.1} parent=27 // pred_region
          %s245 = sand.u32 %s41, 1
          %s246 = scalar_lea.sflag [#allocation3], %s245
          %s247 = sand.u32 %s41, 1
          %s248 = smul.addr %s247, 8
          %s249 = scalar_lea.vmem [#allocation2], %s248
          %s251 = ssub.s32 128, 128
          %252 = vsyncadd %s246, %s251
          %s253 = sadd.s32 %s25, %s24
          %s254 = smul.addr %s253, 128
          %s255 = scalar_lea.hbm %s0, %s254
          %s257 = sshll.u32 %s249, 4
          %s258 = int_to_ptr.vmem [resolvable:$true] %s257
          %260 = dma.hbm_to_vmem [thread:$0]  %s255, 128, %s258, %s246
        $region32: #{tpu_custom_call.1} parent=27 // pred_fallthru
          _
      $region28: #{tpu_custom_call.1} parent=5 // pred_fallthru
        _
      %p261 = scmp.le.s32.totalorder 1, %s17
      %p262 = scmp.lt.s32.totalorder %s17, 3
      %p263 = pnand %p261, %p262
      %p264 = pneg %p263
      // Predicated region
      $region33: #{tpu_custom_call.1} parent=5 // pred_check
        _
      $region34: #{tpu_custom_call.1} parent=5 // pred_check_branch
        %266 = sbr.rel (%p263) target = $region36
      $region35: #{tpu_custom_call.1} parent=5 // pred_region
        %s267 = ssub.s32 %s17, 1
        %s268 = sand.u32 %s44, 1
        %s269 = scalar_lea.sflag [#allocation3], %s268
        %s270 = sand.u32 %s44, 1
        %s271 = smul.addr %s270, 8
        %s272 = scalar_lea.vmem [#allocation2], %s271
        // Predicated region
        $region37: #{tpu_custom_call.1} parent=35 // pred_check
          %p273 = pneg %p57
        $region38: #{tpu_custom_call.1} parent=35 // pred_check_branch
          %275 = sbr.rel (%p273) target = $region40
        $region39: #{tpu_custom_call.1} parent=35 // pred_region
          %276 = dma.done %s269, 128
        $region40: #{tpu_custom_call.1} parent=35 // pred_fallthru
          _
        // Predicated region
        $region41: #{tpu_custom_call.1} parent=35 // pred_check
          %p277 = pneg %p78
        $region42: #{tpu_custom_call.1} parent=35 // pred_check_branch
          %279 = sbr.rel (%p277) target = $region44
        $region43: #{tpu_custom_call.1} parent=35 // pred_region
          %280 = dma.done [#allocation5], 256
        $region44: #{tpu_custom_call.1} parent=35 // pred_fallthru
          _
        %s281 = sand.u32 %s44, 1
        %s282 = scalar_lea.sflag [#allocation3], %s281
        %s283 = sand.u32 %s44, 1
        %s284 = smul.addr %s283, 8
        %s285 = scalar_lea.vmem [#allocation2], %s284
        %p286 = pneg %p57
        %p287 = pneg %p54
        %p288 = pneg %p78
        %p289 = pneg %p75
        %p290 = pneg %p99
        %p291 = pneg %p96
        %p292 = pneg %p120
        %p293 = pneg %p117
        %p294 = pneg %p148
        %p295 = pneg %p145
        %p296 = scmp.lt.s32.totalorder %s26, 1
        %s297 = scalar_select %p296, %s26, 1
        %p298 = scmp.lt.s32.totalorder %s27, 0
        %s299 = scalar_select %p298, %s27, 0
        %s300 = smul.addr %s297, 8
        %s301 = sadd.s32 %s299, %s300
        %s302 = smul.addr %s301, 4
        %s303 = scalar_lea.vmem %s4, %s302
        %p304 = pneg %p176
        %p305 = pneg %p173
        %p306 = scmp.lt.s32.totalorder %s26, 1
        %s307 = scalar_select %p306, %s26, 1
        %p308 = scmp.lt.s32.totalorder %s27, 0
        %s309 = scalar_select %p308, %s27, 0
        %s310 = smul.addr %s307, 8
        %s311 = sadd.s32 %s309, %s310
        %s312 = smul.addr %s311, 4
        %s313 = scalar_lea.vmem %s5, %s312
        %p314 = pneg %p204
        %p315 = pneg %p201
        %p316 = scmp.lt.s32.totalorder %s26, 1
        %s317 = scalar_select %p316, %s26, 1
        %p318 = scmp.lt.s32.totalorder %s27, 0
        %s319 = scalar_select %p318, %s27, 0
        %s320 = smul.addr %s317, 8
        %s321 = sadd.s32 %s319, %s320
        %s322 = smul.addr %s321, 4
        %s323 = scalar_lea.vmem %s6, %s322
        %p324 = scmp.lt.s32.totalorder %s26, 1
        %s325 = scalar_select %p324, %s26, 1
        %p326 = scmp.lt.s32.totalorder %s27, 0
        %s327 = scalar_select %p326, %s27, 0
        %s328 = smul.addr %s325, 8
        %s329 = sadd.s32 %s327, %s328
        %s330 = smul.addr %s329, 4
        %s331 = scalar_lea.vmem %s4, %s330
        %p332 = scmp.lt.s32.totalorder %s26, 1
        %s333 = scalar_select %p332, %s26, 1
        %p334 = scmp.lt.s32.totalorder %s27, 0
        %s335 = scalar_select %p334, %s27, 0
        %s336 = smul.addr %s333, 8
        %s337 = sadd.s32 %s335, %s336
        %s338 = smul.addr %s337, 4
        %s339 = scalar_lea.vmem %s5, %s338
        %p340 = scmp.lt.s32.totalorder %s26, 1
        %s341 = scalar_select %p340, %s26, 1
        %p342 = scmp.lt.s32.totalorder %s27, 0
        %s343 = scalar_select %p342, %s27, 0
        %s344 = smul.addr %s341, 8
        %s345 = sadd.s32 %s343, %s344
        %s346 = smul.addr %s345, 4
        %s347 = scalar_lea.vmem %s6, %s346
        %v349 = vld [vmem:[%s272] sm:$0xff]
        %vm350 = vcmask 261120
        %v351 = vsel %vm350, %v349, 0.0
        %352 = vadd.xlane.f32.xlu0 %v351
        %v353 = vpop.xlane.xlu0 %352
        %v354 = vrcp.pop 32.0
        %v355 = vmul.f32 %v353, %v354
        %v356 = vsub.f32 %v349, %v355
        %v357 = vmul.f32 %v356, %v356
        %v358 = vsel %vm350, %v357, 0.0
        %359 = vadd.xlane.f32.xlu0 %v358
        %v360 = vpop.xlane.xlu0 %359
        %v361 = vmul.f32 %v360, %v354
        %v362 = vadd.f32 %v361, 1e-05
        %v363 = vrsqrt.pop %v362
        %v364 = vmul.f32 %v356, %v363
        %v365 = vld [vmem:[%s2] sm:$0x1]
        %v367 = vlaneseq
        %v368 = vshrl.u32 %v367, 7
        %v369 = vsub.s32 0, %v368
        %v370 = vrot.slane %v365, %v369
        %v372 = vmul.f32 %v364, %v370
        %v373 = vld [vmem:[%s3] sm:$0x1]
        %v375 = vlaneseq
        %v376 = vshrl.u32 %v375, 7
        %v377 = vsub.s32 0, %v376
        %v378 = vrot.slane %v373, %v377
        %v380 = vadd.f32 %v372, %v378
        %v381 = vpack.c.bf16 %v380, %v380
        %v382 = vld [vmem:[#allocation4] sm:$0xf]
        %v383 = vld [vmem:[#allocation4 + $0x4] sm:$0xf]
        %v384 = vld [vmem:[#allocation4 + $0x8] sm:$0xf]
        %v385 = vld [vmem:[#allocation4 + $0xc] sm:$0xf]
        %v390 = vunpack.c.l.b16 %v382
        %v391 = vunpack.c.l.b16 %v383
        %v392 = vunpack.c.l.b16 %v384
        %v393 = vunpack.c.l.b16 %v385
        %v394 = vpack.c.b16 %v391, %v390
        %v395 = vpack.c.b16 %v393, %v392
        %v399 = vsel %vm350, %v381, 0
        %401 = vmatprep.subr.bf16.mxu0 0
        %402 = vmatpush1.bf16.msra.mxu0 %v394
        %403 = vmatprep.subr.bf16.mxu0 0
        %404 = vmatpush1.bf16.msra.mxu0 %v395
        %405 = vmatprep.subr.bf16.mxu0 0
        %406 = vmatpush1.bf16.msra.mxu0 0
        %407 = vmatprep.subr.bf16.mxu0 0
        %408 = vmatpush1.bf16.msra.mxu0 0
        %409 = vmatprep.subr.bf16.mxu0 0
        %410 = vmatpush1.bf16.msra.mxu0 0
        %411 = vmatprep.subr.bf16.mxu0 0
        %412 = vmatpush1.bf16.msra.mxu0 0
        %413 = vmatprep.subr.bf16.mxu0 0
        %414 = vmatpush1.bf16.msra.mxu0 0
        %415 = vmatprep.subr.bf16.mxu0 0
        %416 = vmatpush1.bf16.msra.mxu0 0
        %417 = vmatprep.subr.bf16.mxu0 0
        %418 = vmatpush1.bf16.msra.mxu0 0
        %419 = vmatprep.subr.bf16.mxu0 0
        %420 = vmatpush1.bf16.msra.mxu0 0
        %421 = vmatprep.subr.bf16.mxu0 0
        %422 = vmatpush1.bf16.msra.mxu0 0
        %423 = vmatprep.subr.bf16.mxu0 0
        %424 = vmatpush1.bf16.msra.mxu0 0
        %425 = vmatprep.subr.bf16.mxu0 0
        %426 = vmatpush1.bf16.msra.mxu0 0
        %427 = vmatprep.subr.bf16.mxu0 0
        %428 = vmatpush1.bf16.msra.mxu0 0
        %429 = vmatprep.subr.bf16.mxu0 0
        %430 = vmatpush1.bf16.msra.mxu0 0
        %431 = vmatprep.subr.bf16.mxu0 0
        %432 = vmatpush1.bf16.msra.mxu0 0
        %433 = vmatprep.mubr.bf16.mxu0 0
        %434 = vmatmul.mubr.bf16.gmra.mrb[0].mxu0 %v399
        %v435 = vpop.f32.mrb[0].mxu0
        %v436 = vadd.f32 0.0, %v435
        %v437 = vpop.f32.mrb[0].mxu0
        %v438 = vpop.f32.mrb[0].mxu0
        %v439 = vpop.f32.mrb[0].mxu0
        %440 = vdwg.mxu0
        %v441 = vpack.c.bf16 %v436, %v436
        %vm442 = vcmask 27648
        %443 = vst.msk [vmem:[%s331] sm:$0xf] %vm442, %v441
        %v445 = vunpack.c.l.b16 %v441
        %v446 = vpack.c.b16 %v445, %v445
        %447 = vrot.lane.b32.xlu0 %v446, 96
        %v448 = vpop.permute.xlu0 %447
        %450 = vst.msk [vmem:[%s339] sm:$0xf] %vm442, %v448
        %451 = vrot.lane.b32.xlu0 %v446, 64
        %v452 = vpop.permute.xlu0 %451
        %454 = vst.msk [vmem:[%s347] sm:$0xf] %vm442, %v452
        %455 = vrot.lane.b32.xlu0 %v446, 124
        %v456 = vpop.permute.xlu0 %455
        %s458 = scalar_lea.vmem %s331, 4
        %459 = vst.msk [vmem:[%s458] sm:$0xf] %vm442, %v456
        %460 = vrot.lane.b32.xlu0 %v446, 92
        %v461 = vpop.permute.xlu0 %460
        %s463 = scalar_lea.vmem %s339, 4
        %464 = vst.msk [vmem:[%s463] sm:$0xf] %vm442, %v461
        %465 = vrot.lane.b32.xlu0 %v446, 60
        %v466 = vpop.permute.xlu0 %465
        %s468 = scalar_lea.vmem %s347, 4
        %469 = vst.msk [vmem:[%s468] sm:$0xf] %vm442, %v466
        %470 = vrot.lane.b32.xlu0 %v446, 120
        %v471 = vpop.permute.xlu0 %470
        %s473 = scalar_lea.vmem %s331, 8
        %474 = vst.msk [vmem:[%s473] sm:$0xf] %vm442, %v471
        %475 = vrot.lane.b32.xlu0 %v446, 88
        %v476 = vpop.permute.xlu0 %475
        %s478 = scalar_lea.vmem %s339, 8
        %479 = vst.msk [vmem:[%s478] sm:$0xf] %vm442, %v476
        %480 = vrot.lane.b32.xlu0 %v446, 56
        %v481 = vpop.permute.xlu0 %480
        %s483 = scalar_lea.vmem %s347, 8
        %484 = vst.msk [vmem:[%s483] sm:$0xf] %vm442, %v481
        %485 = vrot.lane.b32.xlu0 %v446, 116
        %v486 = vpop.permute.xlu0 %485
        %s488 = scalar_lea.vmem %s331, 12
        %489 = vst.msk [vmem:[%s488] sm:$0xf] %vm442, %v486
        %490 = vrot.lane.b32.xlu0 %v446, 84
        %v491 = vpop.permute.xlu0 %490
        %s493 = scalar_lea.vmem %s339, 12
        %494 = vst.msk [vmem:[%s493] sm:$0xf] %vm442, %v491
        %495 = vrot.lane.b32.xlu0 %v446, 52
        %v496 = vpop.permute.xlu0 %495
        %s498 = scalar_lea.vmem %s347, 12
        %499 = vst.msk [vmem:[%s498] sm:$0xf] %vm442, %v496
        %500 = vrot.lane.b32.xlu0 %v446, 112
        %v501 = vpop.permute.xlu0 %500
        %s503 = scalar_lea.vmem %s331, 16
        %504 = vst.msk [vmem:[%s503] sm:$0xf] %vm442, %v501
        %505 = vrot.lane.b32.xlu0 %v446, 80
        %v506 = vpop.permute.xlu0 %505
        %s508 = scalar_lea.vmem %s339, 16
        %509 = vst.msk [vmem:[%s508] sm:$0xf] %vm442, %v506
        %510 = vrot.lane.b32.xlu0 %v446, 48
        %v511 = vpop.permute.xlu0 %510
        %s513 = scalar_lea.vmem %s347, 16
        %514 = vst.msk [vmem:[%s513] sm:$0xf] %vm442, %v511
        %515 = vrot.lane.b32.xlu0 %v446, 108
        %v516 = vpop.permute.xlu0 %515
        %s518 = scalar_lea.vmem %s331, 20
        %519 = vst.msk [vmem:[%s518] sm:$0xf] %vm442, %v516
        %520 = vrot.lane.b32.xlu0 %v446, 76
        %v521 = vpop.permute.xlu0 %520
        %s523 = scalar_lea.vmem %s339, 20
        %524 = vst.msk [vmem:[%s523] sm:$0xf] %vm442, %v521
        %525 = vrot.lane.b32.xlu0 %v446, 44
        %v526 = vpop.permute.xlu0 %525
        %s528 = scalar_lea.vmem %s347, 20
        %529 = vst.msk [vmem:[%s528] sm:$0xf] %vm442, %v526
        %530 = vrot.lane.b32.xlu0 %v446, 104
        %v531 = vpop.permute.xlu0 %530
        %s533 = scalar_lea.vmem %s331, 24
        %534 = vst.msk [vmem:[%s533] sm:$0xf] %vm442, %v531
        %535 = vrot.lane.b32.xlu0 %v446, 72
        %v536 = vpop.permute.xlu0 %535
        %s538 = scalar_lea.vmem %s339, 24
        %539 = vst.msk [vmem:[%s538] sm:$0xf] %vm442, %v536
        %540 = vrot.lane.b32.xlu0 %v446, 40
        %v541 = vpop.permute.xlu0 %540
        %s543 = scalar_lea.vmem %s347, 24
        %544 = vst.msk [vmem:[%s543] sm:$0xf] %vm442, %v541
        %545 = vrot.lane.b32.xlu0 %v446, 100
        %v546 = vpop.permute.xlu0 %545
        %s548 = scalar_lea.vmem %s331, 28
        %549 = vst.msk [vmem:[%s548] sm:$0xf] %vm442, %v546
        %550 = vrot.lane.b32.xlu0 %v446, 68
        %v551 = vpop.permute.xlu0 %550
        %s553 = scalar_lea.vmem %s339, 28
        %554 = vst.msk [vmem:[%s553] sm:$0xf] %vm442, %v551
        %555 = vrot.lane.b32.xlu0 %v446, 36
        %v556 = vpop.permute.xlu0 %555
        %s558 = scalar_lea.vmem %s347, 28
        %559 = vst.msk [vmem:[%s558] sm:$0xf] %vm442, %v556
        %p560 = scmp.lt.s32.totalorder %s26, 1
        %s561 = scalar_select %p560, %s26, 1
        %p562 = scmp.lt.s32.totalorder %s27, 0
        %s563 = scalar_select %p562, %s27, 0
        %s564 = smul.addr %s561, 8
        %s565 = sadd.s32 %s563, %s564
        %s566 = smul.addr %s565, 4
        %s567 = scalar_lea.vmem %s4, %s566
        %p568 = scmp.lt.s32.totalorder %s26, 1
        %s569 = scalar_select %p568, %s26, 1
        %p570 = scmp.lt.s32.totalorder %s27, 0
        %s571 = scalar_select %p570, %s27, 0
        %s572 = smul.addr %s569, 8
        %s573 = sadd.s32 %s571, %s572
        %s574 = smul.addr %s573, 4
        %s575 = scalar_lea.vmem %s5, %s574
        %p576 = scmp.lt.s32.totalorder %s26, 1
        %s577 = scalar_select %p576, %s26, 1
        %p578 = scmp.lt.s32.totalorder %s27, 0
        %s579 = scalar_select %p578, %s27, 0
        %s580 = smul.addr %s577, 8
        %s581 = sadd.s32 %s579, %s580
        %s582 = smul.addr %s581, 4
        %s583 = scalar_lea.vmem %s6, %s582
        // Predicated region
        $region45: #{tpu_custom_call.1} parent=35 // pred_check
          %p584 = pneg %p145
        $region46: #{tpu_custom_call.1} parent=35 // pred_check_branch
          %586 = sbr.rel (%p584) target = $region48
        $region47: #{tpu_custom_call.1} parent=35 // pred_region
          _
        $region48: #{tpu_custom_call.1} parent=35 // pred_fallthru
          _
        // Predicated region
        $region49: #{tpu_custom_call.1} parent=35 // pred_check
          %p587 = pneg %p173
        $region50: #{tpu_custom_call.1} parent=35 // pred_check_branch
          %589 = sbr.rel (%p587) target = $region52
        $region51: #{tpu_custom_call.1} parent=35 // pred_region
          _
        $region52: #{tpu_custom_call.1} parent=35 // pred_fallthru
          _
        // Predicated region
        $region53: #{tpu_custom_call.1} parent=35 // pred_check
          %p590 = pneg %p201
        $region54: #{tpu_custom_call.1} parent=35 // pred_check_branch
          %592 = sbr.rel (%p590) target = $region56
        $region55: #{tpu_custom_call.1} parent=35 // pred_region
          _
        $region56: #{tpu_custom_call.1} parent=35 // pred_fallthru
          _
      $region36: #{tpu_custom_call.1} parent=5 // pred_fallthru
        _
      %p593 = scmp.le.s32.totalorder 2, %s17
      // Predicated region
      $region57: #{tpu_custom_call.1} parent=5 // pred_check
        %p594 = pneg %p593
      $region58: #{tpu_custom_call.1} parent=5 // pred_check_branch
        %596 = sbr.rel (%p594) target = $region60
      $region59: #{tpu_custom_call.1} parent=5 // pred_region
        %s597 = ssub.s32 %s17, 2
        // Predicated region
        $region61: #{tpu_custom_call.1} parent=59 // pred_check
          %p598 = pneg %p151
        $region62: #{tpu_custom_call.1} parent=59 // pred_check_branch
          %600 = sbr.rel (%p598) target = $region64
        $region63: #{tpu_custom_call.1} parent=59 // pred_region
          %p601 = scmp.lt.s32.totalorder %s28, 1
          %s602 = scalar_select %p601, %s28, 1
          %p603 = scmp.lt.s32.totalorder %s29, 0
          %s604 = scalar_select %p603, %s29, 0
          %s605 = smul.addr %s602, 8
          %s606 = sadd.s32 %s604, %s605
          %s607 = smul.addr %s606, 4
          %s608 = scalar_lea.vmem %s4, %s607
        $region64: #{tpu_custom_call.1} parent=59 // pred_fallthru
          _
        // Predicated region
        $region65: #{tpu_custom_call.1} parent=59 // pred_check
          %p609 = pneg %p179
        $region66: #{tpu_custom_call.1} parent=59 // pred_check_branch
          %611 = sbr.rel (%p609) target = $region68
        $region67: #{tpu_custom_call.1} parent=59 // pred_region
          %p612 = scmp.lt.s32.totalorder %s28, 1
          %s613 = scalar_select %p612, %s28, 1
          %p614 = scmp.lt.s32.totalorder %s29, 0
          %s615 = scalar_select %p614, %s29, 0
          %s616 = smul.addr %s613, 8
          %s617 = sadd.s32 %s615, %s616
          %s618 = smul.addr %s617, 4
          %s619 = scalar_lea.vmem %s5, %s618
        $region68: #{tpu_custom_call.1} parent=59 // pred_fallthru
          _
        // Predicated region
        $region69: #{tpu_custom_call.1} parent=59 // pred_check
          %p620 = pneg %p207
        $region70: #{tpu_custom_call.1} parent=59 // pred_check_branch
          %622 = sbr.rel (%p620) target = $region72
        $region71: #{tpu_custom_call.1} parent=59 // pred_region
          %p623 = scmp.lt.s32.totalorder %s28, 1
          %s624 = scalar_select %p623, %s28, 1
          %p625 = scmp.lt.s32.totalorder %s29, 0
          %s626 = scalar_select %p625, %s29, 0
          %s627 = smul.addr %s624, 8
          %s628 = sadd.s32 %s626, %s627
          %s629 = smul.addr %s628, 4
          %s630 = scalar_lea.vmem %s6, %s629
        $region72: #{tpu_custom_call.1} parent=59 // pred_fallthru
          _
      $region60: #{tpu_custom_call.1} parent=5 // pred_fallthru
        _
    $region6: #{tpu_custom_call.1} parent=1 // loop_footer
      %s21 = sadd.s32 1, %s17
    $region7: #{tpu_custom_call.1} parent=1 // loop_footer_branch
      %16 = sbr.rel target = $region3
    $region8: #{tpu_custom_call.1} parent=1 // loop_exit
      _
    %631 = vsyncpa [#allocation3], 1
    %s632 = scalar_lea.sflag [#allocation3], 1
    %633 = vsyncpa %s632, 1
    %634 = vsyncpa [#allocation5], 1

// kernel: tpu_custom_call.1
$region0: #{tpu_custom_call.1}
  #allocation0 [shape = 'u32[]', space=smem, size = 0x4, offset = 0x4, fixed_abs, tag = 'smem constant byte address 0x4 - core index']
  #allocation1 [shape = 'u32[144,128]{1,0:T(1,128)}', space=vmem, size = 0x12000, scoped, tag = 'internal scratch']
  %s0 = inlined_call_operand.hbm [shape: f32[2,8,32], index: 0, kind: input, shape index: {}]
  %s1 = inlined_call_operand.hbm [shape: bf16[32,96], index: 1, kind: input, shape index: {}]
  %s2 = inlined_call_operand.vmem [shape: f32[1,32], index: 2, kind: input, shape index: {}]
  %s3 = inlined_call_operand.vmem [shape: f32[1,32], index: 3, kind: input, shape index: {}]
  %s4 = inlined_call_operand.vmem [shape: bf16[2,8,8,4], index: 4, kind: output, shape index: {0}]
  %s5 = inlined_call_operand.vmem [shape: bf16[2,8,8,4], index: 5, kind: output, shape index: {1}]
  %s6 = inlined_call_operand.vmem [shape: bf16[2,8,8,4], index: 6, kind: output, shape index: {2}]
  %7 = xla_tuple %s4, %s5, %s6
  %s8 = sld [smem:[#allocation0]]
  $region73: #{tpu_custom_call.1} parent=0
    _
  %s10 = ssub.s32 1, %s8
  %s11 = scalar_select 0, %s10, %s8
  $region1: #{tpu_custom_call.1} parent=0
    #allocation2 [shape = 'u8[8192]{0}', space=vmem, size = 0x2000, scoped, tag = 'input window, operand 0']
    #allocation3 [shape = 's32[2]{0}', space=sflag, size = 0x8, scoped, tag = 'scoped memory for tpu_custom_call.1']
    #allocation4 [shape = 'u8[8192]{0}', space=vmem, size = 0x2000, scoped, tag = 'input window, operand 1, single buffered']
    #allocation5 [shape = 's32[1]{0}', space=sflag, size = 0x4, scoped, tag = 'scoped memory for tpu_custom_call.1']
    %12 = vsyncpa [#allocation3], 0
    %s13 = scalar_lea.sflag [#allocation3], 1
    %14 = vsyncpa %s13, 0
    %15 = vsyncpa [#allocation5], 0
    loop: start=0, step=1, limit=4
    $region2: #{tpu_custom_call.1} parent=1 // loop_pre_header
      _
    $region3: #{tpu_custom_call.1} parent=1 // loop_header
      %s17 = sphi 0, %s21
      %p18 = scmp.ge.s32.totalorder %s17, 4
      %s24 = sphi 0, %s36
      %s25 = sphi 0, %s32
      %s26 = sphi 0, %s24
      %s27 = sphi 0, %s25
      %s28 = sphi 0, %s26
      %s29 = sphi 0, %s27
      %s41 = sphi 0, %s43
      %s44 = sphi 0, %s41
      %s45 = sphi 0, %s44
      %s61 = sphi 0, %s45
      %s65 = sphi 0, %s65
      %s67 = sphi 0, %s65
      %s68 = sphi 0, %s67
      %s82 = sphi 0, %s68
      %s86 = sphi 0, %s86
      %s88 = sphi 0, %s86
      %s89 = sphi 0, %s88
      %s103 = sphi 0, %s89
      %s107 = sphi 0, %s107
      %s109 = sphi 0, %s107
      %s110 = sphi 0, %s109
      %s124 = sphi 0, %s110
      %s132 = sphi 0, %s134
      %s135 = sphi 0, %s132
      %s136 = sphi 0, %s135
      %s152 = sphi 0, %s136
      %s160 = sphi 0, %s162
      %s163 = sphi 0, %s160
      %s164 = sphi 0, %s163
      %s180 = sphi 0, %s164
      %s188 = sphi 0, %s190
      %s191 = sphi 0, %s188
      %s192 = sphi 0, %s191
      %s208 = sphi 0, %s192
    $region4: #{tpu_custom_call.1} parent=1 // loop_header_branch
      %20 = sbr.rel (%p18) target = $region8
    $region5: #{tpu_custom_call.1} parent=1 // loop_body
      %s22 = ssub.s32 %s17, 1
      %s23 = ssub.s32 %s17, 2
      %s30 = sadd.s32 1, %s25
      %p31 = scmp.ge.s32.totalorder %s30, 1
      %s32 = scalar_select %p31, 0, %s30
      %s33 = sadd.s32 1, %s24
      %s34 = scalar_select %p31, %s33, %s24
      %p35 = scmp.ge.s32.totalorder %s34, 2
      %s36 = scalar_select %p35, 0, %s34
      %s37 = ssub.s32 %s24, %s36
      %s38 = ssub.s32 %s25, %s32
      %s39 = sor.u32 %s37, %s38
      %p40 = scmp.eq.s32.totalorder %s39, 0
      %s42 = sadd.s32 %s41, 1
      %s43 = scalar_select %p40, %s41, %s42
      %p46 = pneg %p40
      %p47 = scmp.eq.s32.totalorder %s17, 1
      %p48 = por %p46, %p47
      %p49 = scmp.ne.s32.totalorder %s41, %s44
      %p50 = scmp.eq.s32.totalorder %s17, 0
      %p51 = por %p49, %p50
      %p52 = scmp.ne.s32.totalorder %s41, %s44
      %p53 = scmp.eq.s32.totalorder %s22, 1
      %p54 = por %p52, %p53
      %p55 = scmp.ne.s32.totalorder %s44, %s45
      %p56 = scmp.eq.s32.totalorder %s22, 0
      %p57 = por %p55, %p56
      %p58 = scmp.ne.s32.totalorder %s44, %s45
      %p59 = scmp.eq.s32.totalorder %s23, 1
      %p60 = por %p58, %p59
      %p62 = scmp.ne.s32.totalorder %s45, %s61
      %p63 = scmp.eq.s32.totalorder %s23, 0
      %p64 = por %p62, %p63
      %s66 = sadd.s32 %s65, 1
      %p69 = scmp.eq.s32.totalorder %s17, 1
      %p70 = scmp.ne.s32.totalorder %s65, %s67
      %p71 = scmp.eq.s32.totalorder %s17, 0
      %p72 = por %p70, %p71
      %p73 = scmp.ne.s32.totalorder %s65, %s67
      %p74 = scmp.eq.s32.totalorder %s22, 1
      %p75 = por %p73, %p74
      %p76 = scmp.ne.s32.totalorder %s67, %s68
      %p77 = scmp.eq.s32.totalorder %s22, 0
      %p78 = por %p76, %p77
      %p79 = scmp.ne.s32.totalorder %s67, %s68
      %p80 = scmp.eq.s32.totalorder %s23, 1
      %p81 = por %p79, %p80
      %p83 = scmp.ne.s32.totalorder %s68, %s82
      %p84 = scmp.eq.s32.totalorder %s23, 0
      %p85 = por %p83, %p84
      %s87 = sadd.s32 %s86, 1
      %p90 = scmp.eq.s32.totalorder %s17, 1
      %p91 = scmp.ne.s32.totalorder %s86, %s88
      %p92 = scmp.eq.s32.totalorder %s17, 0
      %p93 = por %p91, %p92
      %p94 = scmp.ne.s32.totalorder %s86, %s88
      %p95 = scmp.eq.s32.totalorder %s22, 1
      %p96 = por %p94, %p95
      %p97 = scmp.ne.s32.totalorder %s88, %s89
      %p98 = scmp.eq.s32.totalorder %s22, 0
      %p99 = por %p97, %p98
      %p100 = scmp.ne.s32.totalorder %s88, %s89
      %p101 = scmp.eq.s32.totalorder %s23, 1
      %p102 = por %p100, %p101
      %p104 = scmp.ne.s32.totalorder %s89, %s103
      %p105 = scmp.eq.s32.totalorder %s23, 0
      %p106 = por %p104, %p105
      %s108 = sadd.s32 %s107, 1
      %p111 = scmp.eq.s32.totalorder %s17, 1
      %p112 = scmp.ne.s32.totalorder %s107, %s109
      %p113 = scmp.eq.s32.totalorder %s17, 0
      %p114 = por %p112, %p113
      %p115 = scmp.ne.s32.totalorder %s107, %s109
      %p116 = scmp.eq.s32.totalorder %s22, 1
      %p117 = por %p115, %p116
      %p118 = scmp.ne.s32.totalorder %s109, %s110
      %p119 = scmp.eq.s32.totalorder %s22, 0
      %p120 = por %p118, %p119
      %p121 = scmp.ne.s32.totalorder %s109, %s110
      %p122 = scmp.eq.s32.totalorder %s23, 1
      %p123 = por %p121, %p122
      %p125 = scmp.ne.s32.totalorder %s110, %s124
      %p126 = scmp.eq.s32.totalorder %s23, 0
      %p127 = por %p125, %p126
      %s128 = ssub.s32 %s24, %s36
      %s129 = ssub.s32 %s25, %s32
      %s130 = sor.u32 %s128, %s129
      %p131 = scmp.eq.s32.totalorder %s130, 0
      %s133 = sadd.s32 %s132, 1
      %s134 = scalar_select %p131, %s132, %s133
      %p137 = pneg %p131
      %p138 = scmp.eq.s32.totalorder %s17, 1
      %p139 = por %p137, %p138
      %p140 = scmp.ne.s32.totalorder %s132, %s135
      %p141 = scmp.eq.s32.totalorder %s17, 0
      %p142 = por %p140, %p141
      %p143 = scmp.ne.s32.totalorder %s132, %s135
      %p144 = scmp.eq.s32.totalorder %s22, 1
      %p145 = por %p143, %p144
      %p146 = scmp.ne.s32.totalorder %s135, %s136
      %p147 = scmp.eq.s32.totalorder %s22, 0
      %p148 = por %p146, %p147
      %p149 = scmp.ne.s32.totalorder %s135, %s136
      %p150 = scmp.eq.s32.totalorder %s23, 1
      %p151 = por %p149, %p150
      %p153 = scmp.ne.s32.totalorder %s136, %s152
      %p154 = scmp.eq.s32.totalorder %s23, 0
      %p155 = por %p153, %p154
      %s156 = ssub.s32 %s24, %s36
      %s157 = ssub.s32 %s25, %s32
      %s158 = sor.u32 %s156, %s157
      %p159 = scmp.eq.s32.totalorder %s158, 0
      %s161 = sadd.s32 %s160, 1
      %s162 = scalar_select %p159, %s160, %s161
      %p165 = pneg %p159
      %p166 = scmp.eq.s32.totalorder %s17, 1
      %p167 = por %p165, %p166
      %p168 = scmp.ne.s32.totalorder %s160, %s163
      %p169 = scmp.eq.s32.totalorder %s17, 0
      %p170 = por %p168, %p169
      %p171 = scmp.ne.s32.totalorder %s160, %s163
      %p172 = scmp.eq.s32.totalorder %s22, 1
      %p173 = por %p171, %p172
      %p174 = scmp.ne.s32.totalorder %s163, %s164
      %p175 = scmp.eq.s32.totalorder %s22, 0
      %p176 = por %p174, %p175
      %p177 = scmp.ne.s32.totalorder %s163, %s164
      %p178 = scmp.eq.s32.totalorder %s23, 1
      %p179 = por %p177, %p178
      %p181 = scmp.ne.s32.totalorder %s164, %s180
      %p182 = scmp.eq.s32.totalorder %s23, 0
      %p183 = por %p181, %p182
      %s184 = ssub.s32 %s24, %s36
      %s185 = ssub.s32 %s25, %s32
      %s186 = sor.u32 %s184, %s185
      %p187 = scmp.eq.s32.totalorder %s186, 0
      %s189 = sadd.s32 %s188, 1
      %s190 = scalar_select %p187, %s188, %s189
      %p193 = pneg %p187
      %p194 = scmp.eq.s32.totalorder %s17, 1
      %p195 = por %p193, %p194
      %p196 = scmp.ne.s32.totalorder %s188, %s191
      %p197 = scmp.eq.s32.totalorder %s17, 0
      %p198 = por %p196, %p197
      %p199 = scmp.ne.s32.totalorder %s188, %s191
      %p200 = scmp.eq.s32.totalorder %s22, 1
      %p201 = por %p199, %p200
      %p202 = scmp.ne.s32.totalorder %s191, %s192
      %p203 = scmp.eq.s32.totalorder %s22, 0
      %p204 = por %p202, %p203
      %p205 = scmp.ne.s32.totalorder %s191, %s192
      %p206 = scmp.eq.s32.totalorder %s23, 1
      %p207 = por %p205, %p206
      %p209 = scmp.ne.s32.totalorder %s192, %s208
      %p210 = scmp.eq.s32.totalorder %s23, 0
      %p211 = por %p209, %p210
      %p212 = scmp.le.s32.totalorder 1, %s17
      %p213 = scmp.lt.s32.totalorder %s17, 3
      %p214 = pnand %p212, %p213
      %p215 = pneg %p214
      // Predicated region
      $region9: #{tpu_custom_call.1} parent=5 // pred_check
        _
      $region10: #{tpu_custom_call.1} parent=5 // pred_check_branch
        %217 = sbr.rel (%p214) target = $region12
      $region11: #{tpu_custom_call.1} parent=5 // pred_region
        %s218 = ssub.s32 %s17, 1
        // Predicated region
        $region13: #{tpu_custom_call.1} parent=11 // pred_check
          %p219 = pneg %p78
        $region14: #{tpu_custom_call.1} parent=11 // pred_check_branch
          %221 = sbr.rel (%p219) target = $region16
        $region15: #{tpu_custom_call.1} parent=11 // pred_region
          %s223 = ssub.s32 256, 256
          %224 = vsyncadd [#allocation5], %s223
          %s225 = sshll.u32 [#allocation4], 4
          %s226 = int_to_ptr.vmem [resolvable:$true] %s225
          %231 = dma.hbm_to_vmem [thread:$0]  %s1, 256, %s226, [#allocation5], 64, 64, 4
        $region16: #{tpu_custom_call.1} parent=11 // pred_fallthru
          _
        // Predicated region
        $region17: #{tpu_custom_call.1} parent=11 // pred_check
          %p232 = pneg %p99
        $region18: #{tpu_custom_call.1} parent=11 // pred_check_branch
          %234 = sbr.rel (%p232) target = $region20
        $region19: #{tpu_custom_call.1} parent=11 // pred_region
          _
        $region20: #{tpu_custom_call.1} parent=11 // pred_fallthru
          _
        // Predicated region
        $region21: #{tpu_custom_call.1} parent=11 // pred_check
          %p235 = pneg %p120
        $region22: #{tpu_custom_call.1} parent=11 // pred_check_branch
          %237 = sbr.rel (%p235) target = $region24
        $region23: #{tpu_custom_call.1} parent=11 // pred_region
          _
        $region24: #{tpu_custom_call.1} parent=11 // pred_fallthru
          _
      $region12: #{tpu_custom_call.1} parent=5 // pred_fallthru
        _
      %p238 = scmp.lt.s32.totalorder %s17, 2
      // Predicated region
      $region25: #{tpu_custom_call.1} parent=5 // pred_check
        %p239 = pneg %p238
      $region26: #{tpu_custom_call.1} parent=5 // pred_check_branch
        %241 = sbr.rel (%p239) target = $region28
      $region27: #{tpu_custom_call.1} parent=5 // pred_region
        // Predicated region
        $region29: #{tpu_custom_call.1} parent=27 // pred_check
          %p242 = pneg %p51
        $region30: #{tpu_custom_call.1} parent=27 // pred_check_branch
          %244 = sbr.rel (%p242) target = $region32
        $region31: #{tpu_custom_call.1} parent=27 // pred_region
          %s245 = sand.u32 %s41, 1
          %s246 = scalar_lea.sflag [#allocation3], %s245
          %s247 = sand.u32 %s41, 1
          %s248 = smul.addr %s247, 8
          %s249 = scalar_lea.vmem [#allocation2], %s248
          %s251 = ssub.s32 128, 128
          %252 = vsyncadd %s246, %s251
          %s253 = sadd.s32 %s25, %s24
          %s254 = smul.addr %s253, 128
          %s255 = scalar_lea.hbm %s0, %s254
          %s257 = sshll.u32 %s249, 4
          %s258 = int_to_ptr.vmem [resolvable:$true] %s257
          %260 = dma.hbm_to_vmem [thread:$0]  %s255, 128, %s258, %s246
        $region32: #{tpu_custom_call.1} parent=27 // pred_fallthru
          _
      $region28: #{tpu_custom_call.1} parent=5 // pred_fallthru
        _
      %p261 = scmp.le.s32.totalorder 1, %s17
      %p262 = scmp.lt.s32.totalorder %s17, 3
      %p263 = pnand %p261, %p262
      %p264 = pneg %p263
      // Predicated region
      $region33: #{tpu_custom_call.1} parent=5 // pred_check
        _
      $region34: #{tpu_custom_call.1} parent=5 // pred_check_branch
        %266 = sbr.rel (%p263) target = $region36
      $region35: #{tpu_custom_call.1} parent=5 // pred_region
        %s267 = ssub.s32 %s17, 1
        %s268 = sand.u32 %s44, 1
        %s269 = scalar_lea.sflag [#allocation3], %s268
        %s270 = sand.u32 %s44, 1
        %s271 = smul.addr %s270, 8
        %s272 = scalar_lea.vmem [#allocation2], %s271
        // Predicated region
        $region37: #{tpu_custom_call.1} parent=35 // pred_check
          %p273 = pneg %p57
        $region38: #{tpu_custom_call.1} parent=35 // pred_check_branch
          %275 = sbr.rel (%p273) target = $region40
        $region39: #{tpu_custom_call.1} parent=35 // pred_region
          %276 = dma.done %s269, 128
        $region40: #{tpu_custom_call.1} parent=35 // pred_fallthru
          _
        // Predicated region
        $region41: #{tpu_custom_call.1} parent=35 // pred_check
          %p277 = pneg %p78
        $region42: #{tpu_custom_call.1} parent=35 // pred_check_branch
          %279 = sbr.rel (%p277) target = $region44
        $region43: #{tpu_custom_call.1} parent=35 // pred_region
          %280 = dma.done [#allocation5], 256
        $region44: #{tpu_custom_call.1} parent=35 // pred_fallthru
          _
        %s281 = sand.u32 %s44, 1
        %s282 = scalar_lea.sflag [#allocation3], %s281
        %s283 = sand.u32 %s44, 1
        %s284 = smul.addr %s283, 8
        %s285 = scalar_lea.vmem [#allocation2], %s284
        %p286 = pneg %p57
        %p287 = pneg %p54
        %p288 = pneg %p78
        %p289 = pneg %p75
        %p290 = pneg %p99
        %p291 = pneg %p96
        %p292 = pneg %p120
        %p293 = pneg %p117
        %p294 = pneg %p148
        %p295 = pneg %p145
        %p296 = scmp.lt.s32.totalorder %s26, 1
        %s297 = scalar_select %p296, %s26, 1
        %p298 = scmp.lt.s32.totalorder %s27, 0
        %s299 = scalar_select %p298, %s27, 0
        %s300 = smul.addr %s297, 8
        %s301 = sadd.s32 %s299, %s300
        %s302 = smul.addr %s301, 4
        %s303 = scalar_lea.vmem %s4, %s302
        %p304 = pneg %p176
        %p305 = pneg %p173
        %p306 = scmp.lt.s32.totalorder %s26, 1
        %s307 = scalar_select %p306, %s26, 1
        %p308 = scmp.lt.s32.totalorder %s27, 0
        %s309 = scalar_select %p308, %s27, 0
        %s310 = smul.addr %s307, 8
        %s311 = sadd.s32 %s309, %s310
        %s312 = smul.addr %s311, 4
        %s313 = scalar_lea.vmem %s5, %s312
        %p314 = pneg %p204
        %p315 = pneg %p201
        %p316 = scmp.lt.s32.totalorder %s26, 1
        %s317 = scalar_select %p316, %s26, 1
        %p318 = scmp.lt.s32.totalorder %s27, 0
        %s319 = scalar_select %p318, %s27, 0
        %s320 = smul.addr %s317, 8
        %s321 = sadd.s32 %s319, %s320
        %s322 = smul.addr %s321, 4
        %s323 = scalar_lea.vmem %s6, %s322
        %p324 = scmp.lt.s32.totalorder %s26, 1
        %s325 = scalar_select %p324, %s26, 1
        %p326 = scmp.lt.s32.totalorder %s27, 0
        %s327 = scalar_select %p326, %s27, 0
        %s328 = smul.addr %s325, 8
        %s329 = sadd.s32 %s327, %s328
        %s330 = smul.addr %s329, 4
        %s331 = scalar_lea.vmem %s4, %s330
        %p332 = scmp.lt.s32.totalorder %s26, 1
        %s333 = scalar_select %p332, %s26, 1
        %p334 = scmp.lt.s32.totalorder %s27, 0
        %s335 = scalar_select %p334, %s27, 0
        %s336 = smul.addr %s333, 8
        %s337 = sadd.s32 %s335, %s336
        %s338 = smul.addr %s337, 4
        %s339 = scalar_lea.vmem %s5, %s338
        %p340 = scmp.lt.s32.totalorder %s26, 1
        %s341 = scalar_select %p340, %s26, 1
        %p342 = scmp.lt.s32.totalorder %s27, 0
        %s343 = scalar_select %p342, %s27, 0
        %s344 = smul.addr %s341, 8
        %s345 = sadd.s32 %s343, %s344
        %s346 = smul.addr %s345, 4
        %s347 = scalar_lea.vmem %s6, %s346
        %v349 = vld [vmem:[%s272] sm:$0xff]
        %vm350 = vcmask 261120
        %v351 = vsel %vm350, %v349, 0.0
        %352 = vadd.xlane.f32.xlu0 %v351
        %v353 = vpop.xlane.xlu0 %352
        %v354 = vrcp.pop 32.0
        %v355 = vmul.f32 %v353, %v354
        %v356 = vsub.f32 %v349, %v355
        %v357 = vmul.f32 %v356, %v356
        %v358 = vsel %vm350, %v357, 0.0
        %359 = vadd.xlane.f32.xlu0 %v358
        %v360 = vpop.xlane.xlu0 %359
        %v361 = vmul.f32 %v360, %v354
        %v362 = vadd.f32 %v361, 1e-05
        %v363 = vrsqrt.pop %v362
        %v364 = vmul.f32 %v356, %v363
        %v365 = vld [vmem:[%s2] sm:$0x1]
        %v367 = vlaneseq
        %v368 = vshrl.u32 %v367, 7
        %v369 = vsub.s32 0, %v368
        %v370 = vrot.slane %v365, %v369
        %v372 = vmul.f32 %v364, %v370
        %v373 = vld [vmem:[%s3] sm:$0x1]
        %v375 = vlaneseq
        %v376 = vshrl.u32 %v375, 7
        %v377 = vsub.s32 0, %v376
        %v378 = vrot.slane %v373, %v377
        %v380 = vadd.f32 %v372, %v378
        %v381 = vpack.c.bf16 %v380, %v380
        %v382 = vld [vmem:[#allocation4] sm:$0xf]
        %v383 = vld [vmem:[#allocation4 + $0x4] sm:$0xf]
        %v384 = vld [vmem:[#allocation4 + $0x8] sm:$0xf]
        %v385 = vld [vmem:[#allocation4 + $0xc] sm:$0xf]
        %v390 = vunpack.c.l.b16 %v382
        %v391 = vunpack.c.l.b16 %v383
        %v392 = vunpack.c.l.b16 %v384
        %v393 = vunpack.c.l.b16 %v385
        %v394 = vpack.c.b16 %v391, %v390
        %v395 = vpack.c.b16 %v393, %v392
        %v399 = vsel %vm350, %v381, 0
        %401 = vmatprep.subr.bf16.mxu0 0
        %402 = vmatpush1.bf16.msra.mxu0 %v394
        %403 = vmatprep.subr.bf16.mxu0 0
        %404 = vmatpush1.bf16.msra.mxu0 %v395
        %405 = vmatprep.subr.bf16.mxu0 0
        %406 = vmatpush1.bf16.msra.mxu0 0
        %407 = vmatprep.subr.bf16.mxu0 0
        %408 = vmatpush1.bf16.msra.mxu0 0
        %409 = vmatprep.subr.bf16.mxu0 0
        %410 = vmatpush1.bf16.msra.mxu0 0
        %411 = vmatprep.subr.bf16.mxu0 0
        %412 = vmatpush1.bf16.msra.mxu0 0
        %413 = vmatprep.subr.bf16.mxu0 0
        %414 = vmatpush1.bf16.msra.mxu0 0
        %415 = vmatprep.subr.bf16.mxu0 0
        %416 = vmatpush1.bf16.msra.mxu0 0
        %417 = vmatprep.subr.bf16.mxu0 0
        %418 = vmatpush1.bf16.msra.mxu0 0
        %419 = vmatprep.subr.bf16.mxu0 0
        %420 = vmatpush1.bf16.msra.mxu0 0
        %421 = vmatprep.subr.bf16.mxu0 0
        %422 = vmatpush1.bf16.msra.mxu0 0
        %423 = vmatprep.subr.bf16.mxu0 0
        %424 = vmatpush1.bf16.msra.mxu0 0
        %425 = vmatprep.subr.bf16.mxu0 0
        %426 = vmatpush1.bf16.msra.mxu0 0
        %427 = vmatprep.subr.bf16.mxu0 0
        %428 = vmatpush1.bf16.msra.mxu0 0
        %429 = vmatprep.subr.bf16.mxu0 0
        %430 = vmatpush1.bf16.msra.mxu0 0
        %431 = vmatprep.subr.bf16.mxu0 0
        %432 = vmatpush1.bf16.msra.mxu0 0
        %433 = vmatprep.mubr.bf16.mxu0 0
        %434 = vmatmul.mubr.bf16.gmra.mrb[0].mxu0 %v399
        %v435 = vpop.f32.mrb[0].mxu0
        %v436 = vadd.f32 0.0, %v435
        %v437 = vpop.f32.mrb[0].mxu0
        %v438 = vpop.f32.mrb[0].mxu0
        %v439 = vpop.f32.mrb[0].mxu0
        %440 = vdwg.mxu0
        %v441 = vpack.c.bf16 %v436, %v436
        %vm442 = vcmask 27648
        %443 = vst.msk [vmem:[%s331] sm:$0xf] %vm442, %v441
        %v445 = vunpack.c.l.b16 %v441
        %v446 = vpack.c.b16 %v445, %v445
        %447 = vrot.lane.b32.xlu0 %v446, 96
        %v448 = vpop.permute.xlu0 %447
        %450 = vst.msk [vmem:[%s339] sm:$0xf] %vm442, %v448
        %451 = vrot.lane.b32.xlu0 %v446, 64
        %v452 = vpop.permute.xlu0 %451
        %454 = vst.msk [vmem:[%s347] sm:$0xf] %vm442, %v452
        %455 = vrot.lane.b32.xlu0 %v446, 124
        %v456 = vpop.permute.xlu0 %455
        %s458 = scalar_lea.vmem %s331, 4
        %459 = vst.msk [vmem:[%s458] sm:$0xf] %vm442, %v456
        %460 = vrot.lane.b32.xlu0 %v446, 92
        %v461 = vpop.permute.xlu0 %460
        %s463 = scalar_lea.vmem %s339, 4
        %464 = vst.msk [vmem:[%s463] sm:$0xf] %vm442, %v461
        %465 = vrot.lane.b32.xlu0 %v446, 60
        %v466 = vpop.permute.xlu0 %465
        %s468 = scalar_lea.vmem %s347, 4
        %469 = vst.msk [vmem:[%s468] sm:$0xf] %vm442, %v466
        %470 = vrot.lane.b32.xlu0 %v446, 120
        %v471 = vpop.permute.xlu0 %470
        %s473 = scalar_lea.vmem %s331, 8
        %474 = vst.msk [vmem:[%s473] sm:$0xf] %vm442, %v471
        %475 = vrot.lane.b32.xlu0 %v446, 88
        %v476 = vpop.permute.xlu0 %475
        %s478 = scalar_lea.vmem %s339, 8
        %479 = vst.msk [vmem:[%s478] sm:$0xf] %vm442, %v476
        %480 = vrot.lane.b32.xlu0 %v446, 56
        %v481 = vpop.permute.xlu0 %480
        %s483 = scalar_lea.vmem %s347, 8
        %484 = vst.msk [vmem:[%s483] sm:$0xf] %vm442, %v481
        %485 = vrot.lane.b32.xlu0 %v446, 116
        %v486 = vpop.permute.xlu0 %485
        %s488 = scalar_lea.vmem %s331, 12
        %489 = vst.msk [vmem:[%s488] sm:$0xf] %vm442, %v486
        %490 = vrot.lane.b32.xlu0 %v446, 84
        %v491 = vpop.permute.xlu0 %490
        %s493 = scalar_lea.vmem %s339, 12
        %494 = vst.msk [vmem:[%s493] sm:$0xf] %vm442, %v491
        %495 = vrot.lane.b32.xlu0 %v446, 52
        %v496 = vpop.permute.xlu0 %495
        %s498 = scalar_lea.vmem %s347, 12
        %499 = vst.msk [vmem:[%s498] sm:$0xf] %vm442, %v496
        %500 = vrot.lane.b32.xlu0 %v446, 112
        %v501 = vpop.permute.xlu0 %500
        %s503 = scalar_lea.vmem %s331, 16
        %504 = vst.msk [vmem:[%s503] sm:$0xf] %vm442, %v501
        %505 = vrot.lane.b32.xlu0 %v446, 80
        %v506 = vpop.permute.xlu0 %505
        %s508 = scalar_lea.vmem %s339, 16
        %509 = vst.msk [vmem:[%s508] sm:$0xf] %vm442, %v506
        %510 = vrot.lane.b32.xlu0 %v446, 48
        %v511 = vpop.permute.xlu0 %510
        %s513 = scalar_lea.vmem %s347, 16
        %514 = vst.msk [vmem:[%s513] sm:$0xf] %vm442, %v511
        %515 = vrot.lane.b32.xlu0 %v446, 108
        %v516 = vpop.permute.xlu0 %515
        %s518 = scalar_lea.vmem %s331, 20
        %519 = vst.msk [vmem:[%s518] sm:$0xf] %vm442, %v516
        %520 = vrot.lane.b32.xlu0 %v446, 76
        %v521 = vpop.permute.xlu0 %520
        %s523 = scalar_lea.vmem %s339, 20
        %524 = vst.msk [vmem:[%s523] sm:$0xf] %vm442, %v521
        %525 = vrot.lane.b32.xlu0 %v446, 44
        %v526 = vpop.permute.xlu0 %525
        %s528 = scalar_lea.vmem %s347, 20
        %529 = vst.msk [vmem:[%s528] sm:$0xf] %vm442, %v526
        %530 = vrot.lane.b32.xlu0 %v446, 104
        %v531 = vpop.permute.xlu0 %530
        %s533 = scalar_lea.vmem %s331, 24
        %534 = vst.msk [vmem:[%s533] sm:$0xf] %vm442, %v531
        %535 = vrot.lane.b32.xlu0 %v446, 72
        %v536 = vpop.permute.xlu0 %535
        %s538 = scalar_lea.vmem %s339, 24
        %539 = vst.msk [vmem:[%s538] sm:$0xf] %vm442, %v536
        %540 = vrot.lane.b32.xlu0 %v446, 40
        %v541 = vpop.permute.xlu0 %540
        %s543 = scalar_lea.vmem %s347, 24
        %544 = vst.msk [vmem:[%s543] sm:$0xf] %vm442, %v541
        %545 = vrot.lane.b32.xlu0 %v446, 100
        %v546 = vpop.permute.xlu0 %545
        %s548 = scalar_lea.vmem %s331, 28
        %549 = vst.msk [vmem:[%s548] sm:$0xf] %vm442, %v546
        %550 = vrot.lane.b32.xlu0 %v446, 68
        %v551 = vpop.permute.xlu0 %550
        %s553 = scalar_lea.vmem %s339, 28
        %554 = vst.msk [vmem:[%s553] sm:$0xf] %vm442, %v551
        %555 = vrot.lane.b32.xlu0 %v446, 36
        %v556 = vpop.permute.xlu0 %555
        %s558 = scalar_lea.vmem %s347, 28
        %559 = vst.msk [vmem:[%s558] sm:$0xf] %vm442, %v556
        %p560 = scmp.lt.s32.totalorder %s26, 1
        %s561 = scalar_select %p560, %s26, 1
        %p562 = scmp.lt.s32.totalorder %s27, 0
        %s563 = scalar_select %p562, %s27, 0
        %s564 = smul.addr %s561, 8
        %s565 = sadd.s32 %s563, %s564
        %s566 = smul.addr %s565, 4
        %s567 = scalar_lea.vmem %s4, %s566
        %p568 = scmp.lt.s32.totalorder %s26, 1
        %s569 = scalar_select %p568, %s26, 1
        %p570 = scmp.lt.s32.totalorder %s27, 0
        %s571 = scalar_select %p570, %s27, 0
        %s572 = smul.addr %s569, 8
        %s573 = sadd.s32 %s571, %s572
        %s574 = smul.addr %s573, 4
        %s575 = scalar_lea.vmem %s5, %s574
        %p576 = scmp.lt.s32.totalorder %s26, 1
        %s577 = scalar_select %p576, %s26, 1
        %p578 = scmp.lt.s32.totalorder %s27, 0
        %s579 = scalar_select %p578, %s27, 0
        %s580 = smul.addr %s577, 8
        %s581 = sadd.s32 %s579, %s580
        %s582 = smul.addr %s581, 4
        %s583 = scalar_lea.vmem %s6, %s582
        // Predicated region
        $region45: #{tpu_custom_call.1} parent=35 // pred_check
          %p584 = pneg %p145
        $region46: #{tpu_custom_call.1} parent=35 // pred_check_branch
          %586 = sbr.rel (%p584) target = $region48
        $region47: #{tpu_custom_call.1} parent=35 // pred_region
          _
        $region48: #{tpu_custom_call.1} parent=35 // pred_fallthru
          _
        // Predicated region
        $region49: #{tpu_custom_call.1} parent=35 // pred_check
          %p587 = pneg %p173
        $region50: #{tpu_custom_call.1} parent=35 // pred_check_branch
          %589 = sbr.rel (%p587) target = $region52
        $region51: #{tpu_custom_call.1} parent=35 // pred_region
          _
        $region52: #{tpu_custom_call.1} parent=35 // pred_fallthru
          _
        // Predicated region
        $region53: #{tpu_custom_call.1} parent=35 // pred_check
          %p590 = pneg %p201
        $region54: #{tpu_custom_call.1} parent=35 // pred_check_branch
          %592 = sbr.rel (%p590) target = $region56
        $region55: #{tpu_custom_call.1} parent=35 // pred_region
          _
        $region56: #{tpu_custom_call.1} parent=35 // pred_fallthru
          _
      $region36: #{tpu_custom_call.1} parent=5 // pred_fallthru
        _
      %p593 = scmp.le.s32.totalorder 2, %s17
      // Predicated region
      $region57: #{tpu_custom_call.1} parent=5 // pred_check
        %p594 = pneg %p593
      $region58: #{tpu_custom_call.1} parent=5 // pred_check_branch
        %596 = sbr.rel (%p594) target = $region60
      $region59: #{tpu_custom_call.1} parent=5 // pred_region
        %s597 = ssub.s32 %s17, 2
        // Predicated region
        $region61: #{tpu_custom_call.1} parent=59 // pred_check
          %p598 = pneg %p151
        $region62: #{tpu_custom_call.1} parent=59 // pred_check_branch
          %600 = sbr.rel (%p598) target = $region64
        $region63: #{tpu_custom_call.1} parent=59 // pred_region
          %p601 = scmp.lt.s32.totalorder %s28, 1
          %s602 = scalar_select %p601, %s28, 1
          %p603 = scmp.lt.s32.totalorder %s29, 0
          %s604 = scalar_select %p603, %s29, 0
          %s605 = smul.addr %s602, 8
          %s606 = sadd.s32 %s604, %s605
          %s607 = smul.addr %s606, 4
          %s608 = scalar_lea.vmem %s4, %s607
        $region64: #{tpu_custom_call.1} parent=59 // pred_fallthru
          _
        // Predicated region
        $region65: #{tpu_custom_call.1} parent=59 // pred_check
          %p609 = pneg %p179
        $region66: #{tpu_custom_call.1} parent=59 // pred_check_branch
          %611 = sbr.rel (%p609) target = $region68
        $region67: #{tpu_custom_call.1} parent=59 // pred_region
          %p612 = scmp.lt.s32.totalorder %s28, 1
          %s613 = scalar_select %p612, %s28, 1
          %p614 = scmp.lt.s32.totalorder %s29, 0
          %s615 = scalar_select %p614, %s29, 0
          %s616 = smul.addr %s613, 8
          %s617 = sadd.s32 %s615, %s616
          %s618 = smul.addr %s617, 4
          %s619 = scalar_lea.vmem %s5, %s618
        $region68: #{tpu_custom_call.1} parent=59 // pred_fallthru
          _
        // Predicated region
        $region69: #{tpu_custom_call.1} parent=59 // pred_check
          %p620 = pneg %p207
        $region70: #{tpu_custom_call.1} parent=59 // pred_check_branch
          %622 = sbr.rel (%p620) target = $region72
        $region71: #{tpu_custom_call.1} parent=59 // pred_region
          %p623 = scmp.lt.s32.totalorder %s28, 1
          %s624 = scalar_select %p623, %s28, 1
          %p625 = scmp.lt.s32.totalorder %s29, 0
          %s626 = scalar_select %p625, %s29, 0
          %s627 = smul.addr %s624, 8
          %s628 = sadd.s32 %s626, %s627
          %s629 = smul.addr %s628, 4
          %s630 = scalar_lea.vmem %s6, %s629
        $region72: #{tpu_custom_call.1} parent=59 // pred_fallthru
          _
      $region60: #{tpu_custom_call.1} parent=5 // pred_fallthru
        _
    $region6: #{tpu_custom_call.1} parent=1 // loop_footer
      %s21 = sadd.s32 1, %s17
    $region7: #{tpu_custom_call.1} parent=1 // loop_footer_branch
      %16 = sbr.rel target = $region3
    $region8: #{tpu_custom_call.1} parent=1 // loop_exit
      _
    %631 = vsyncpa [#allocation3], 1
    %s632 = scalar_lea.sflag [#allocation3], 1
    %633 = vsyncpa %s632, 1
    %634 = vsyncpa [#allocation5], 1

</llo_original>
